<compile_context>
chip_gen: v6e
topology: v6e:2x2x1
jax: 0.10.0
libtpu: 0.0.40
codegen_flags: <defaults>
</compile_context>

<pallas_src>
import functools

import jax
import jax.numpy as jnp
from jax.experimental import pallas as pl
from jax.experimental.pallas import tpu as pltpu


# ----------------------------------------------------------------------------- kernel


def _encoder_kernel(a_ref,                               # (N,)   SMEM  residual scales (scalar prefetch)
                    x_ref,                               # (1, T, F)    bf16
                    pw_ref, pb_ref,                      # (F, C) bf16 / (1, C) f32
                    w1_ref, b1_ref, g1_ref, be1_ref,     # (N, K*C, C) bf16 / (N, C) f32 x3
                    w2_ref, b2_ref, g2_ref, be2_ref,     # (N, K*C, C) bf16 / (N, C) f32 x3
                    ow_ref, ob_ref,                      # (C, C) bf16 / (1, C) f32
                    o_ref,                               # (1, T, C)    f32
                    hpad_ref,                            # (pad + T, C) f32 VMEM scratch
                    *, dilations, K, pad, eps):
    T = x_ref.shape[1]
    C = pw_ref.shape[1]

    # Zero the causal halo once per grid step.  Rows [0, pad) are never written again,
    # so every dilated tap that reaches before t=0 reads zeros (== ZeroPad2d((K-1)*d, 0)).
    hpad_ref[pl.ds(0, pad), :] = jnp.zeros((pad, C), hpad_ref.dtype)

    def conv_ln_relu(n, w_ref, b_ref, g_ref, be_ref, dilation):
        # Causal dilated conv over time: all K taps fused into one lane-dense
        # (T, K*C) x (K*C, C) MXU contraction (static halo slices, no roll / mask).
        taps = [hpad_ref[pl.ds(pad - (K - 1 - k) * dilation, T), :] for k in range(K)]
        xcat = jnp.concatenate(taps, axis=-1).astype(jnp.bfloat16)        # (T, K*C)
        y = jnp.dot(xcat, w_ref[n], preferred_element_type=jnp.float32)   # (T, C) f32
        y = y + b_ref[n:n + 1, :]
        # LayerNorm over channels (f32 statistics, eps matches nn.LayerNorm(C, eps=1e-8)).
        mean = jnp.mean(y, axis=-1, keepdims=True)
        cen = y - mean
        var = jnp.mean(cen * cen, axis=-1, keepdims=True)
        y = cen * jax.lax.rsqrt(var + eps) * g_ref[n:n + 1, :] + be_ref[n:n + 1, :]
        return jnp.maximum(y, 0.0)                                        # ReLU

    # Input projection (bf16 MXU inputs, f32 accumulate).
    h = jnp.dot(x_ref[0], pw_ref[...], preferred_element_type=jnp.float32) + pb_ref[...]

    # Residual blocks, statically unrolled; activation stays VMEM/vreg resident.
    for n, d in enumerate(dilations):
        hpad_ref[pl.ds(pad, T), :] = h
        h1 = conv_ln_relu(n, w1_ref, b1_ref, g1_ref, be1_ref, d)
        hpad_ref[pl.ds(pad, T), :] = h1
        h2 = conv_ln_relu(n, w2_ref, b2_ref, g2_ref, be2_ref, 2 * d)
        h = a_ref[n] * h2 + h          # residual scale read from the scalar path

    # Output linear (TCN.output), f32 accumulate, lane-dense f32 store.
    o = jnp.dot(h.astype(jnp.bfloat16), ow_ref[...],
                preferred_element_type=jnp.float32) + ob_ref[...]
    o_ref[0] = o.astype(o_ref.dtype)


# ----------------------------------------------------------------------------- wrapper


def encoder_forward(x, params, dil_list, K=3):
    B, T0, F = x.shape
    C = params["proj_w"].shape[1]
    N = len(dil_list)

    T = ((T0 + 7) // 8) * 8                      # sublane-aligned time extent
    pad = (K - 1) * 2 * max(dil_list)            # halo for the largest effective dilation

    xp = x if T == T0 else jnp.pad(x, ((0, 0), (0, T - T0), (0, 0)))
    xp = xp.astype(jnp.bfloat16)

    # bf16 MXU operands; biases / LayerNorm affine / residual scale stay f32.
    pw = params["proj_w"].astype(jnp.bfloat16)
    ow = params["out_w"].astype(jnp.bfloat16)
    w1 = params["w1"].reshape(N, K * C, C).astype(jnp.bfloat16)
    w2 = params["w2"].reshape(N, K * C, C).astype(jnp.bfloat16)
    pb, ob = params["proj_b"], params["out_b"]
    b1, g1, be1 = params["b1"], params["g1"], params["be1"]
    b2, g2, be2 = params["b2"], params["g2"], params["be2"]
    a = params["a"]

    kernel = functools.partial(_encoder_kernel, dilations=tuple(int(d) for d in dil_list),
                               K=K, pad=pad, eps=1e-8)

    grid_spec = pltpu.PrefetchScalarGridSpec(
        num_scalar_prefetch=1,                   # `a` -> SMEM, scalar path
        grid=(B,),
        in_specs=[
            pl.BlockSpec((1, T, F), lambda i, a_s: (i, 0, 0)),
            pl.BlockSpec((F, C), lambda i, a_s: (0, 0)),
            pl.BlockSpec((1, C), lambda i, a_s: (0, 0)),
            pl.BlockSpec((N, K * C, C), lambda i, a_s: (0, 0, 0)),
            pl.BlockSpec((N, C), lambda i, a_s: (0, 0)),
            pl.BlockSpec((N, C), lambda i, a_s: (0, 0)),
            pl.BlockSpec((N, C), lambda i, a_s: (0, 0)),
            pl.BlockSpec((N, K * C, C), lambda i, a_s: (0, 0, 0)),
            pl.BlockSpec((N, C), lambda i, a_s: (0, 0)),
            pl.BlockSpec((N, C), lambda i, a_s: (0, 0)),
            pl.BlockSpec((N, C), lambda i, a_s: (0, 0)),
            pl.BlockSpec((C, C), lambda i, a_s: (0, 0)),
            pl.BlockSpec((1, C), lambda i, a_s: (0, 0)),
        ],
        out_specs=pl.BlockSpec((1, T, C), lambda i, a_s: (i, 0, 0)),
        scratch_shapes=[pltpu.VMEM((pad + T, C), jnp.float32)],
    )

    # Explicit VMEM budget (weights are single-buffered since their block index is
    # constant); capped at 48 MiB so it stays safe on v7x's 64 MiB physical VMEM.
    operands = (xp, pw, pb, w1, b1, g1, be1, w2, b2, g2, be2, ow, ob)
    est = sum(int(op.size) * op.dtype.itemsize for op in operands)
    est += 2 * T * C * 4 + (pad + T) * C * 4
    vmem_limit = int(min(max(3 * est, 32 * 1024 * 1024), 48 * 1024 * 1024))

    out = pl.pallas_call(
        kernel,
        out_shape=jax.ShapeDtypeStruct((B, T, C), jnp.float32),
        grid_spec=grid_spec,
        compiler_params=pltpu.CompilerParams(
            dimension_semantics=("parallel",),
            vmem_limit_bytes=vmem_limit,
        ),
    )(a, xp, pw, pb, w1, b1, g1, be1, w2, b2, g2, be2, ow, ob)
    return out[:, :T0, :]


# ----------------------------------------------------------------------------- params


def init_params(key, feat_num, hidden, block_num, dilations, K=3):
    dil_list = list(dilations) * block_num
    N = len(dil_list)
    keys = jax.random.split(key, 2 + 4 * N)
    kw1, kw2 = keys[2:2 + N], keys[2 + N:2 + 2 * N]
    kb1, kb2 = keys[2 + 2 * N:2 + 3 * N], keys[2 + 3 * N:2 + 4 * N]

    def bf16_rt(w):                     # bf16-representable master weights (kernel uses bf16)
        return w.astype(jnp.bfloat16).astype(jnp.float32)

    def xavier(k, fan_in, fan_out):
        std = (2.0 / (fan_in + fan_out)) ** 0.5
        return bf16_rt(std * jax.random.normal(k, (fan_in, fan_out), jnp.float32))

    conv_scale = (1.0 / (hidden * K)) ** 0.5

    def conv_w(k):                      # stored as (K, Cin, Cout); PyTorch Conv2d is (Cout, Cin, 1, K)
        return bf16_rt(conv_scale * jax.random.normal(k, (K, hidden, hidden), jnp.float32))

    params = {
        "proj_w": xavier(keys[0], feat_num, hidden),
        "proj_b": jnp.zeros((1, hidden), jnp.float32),
        "out_w": xavier(keys[1], hidden, hidden),
        "out_b": jnp.full((1, hidden), 0.1, jnp.float32),          # TCN._init_weights bias
        "w1": jnp.stack([conv_w(kw1[i]) for i in range(N)]),
        "b1": jnp.stack([0.01 * jax.random.normal(kb1[i], (hidden,), jnp.float32) for i in range(N)]),
        "g1": jnp.ones((N, hidden), jnp.float32),
        "be1": jnp.zeros((N, hidden), jnp.float32),
        "w2": jnp.stack([conv_w(kw2[i]) for i in range(N)]),
        "b2": jnp.stack([0.01 * jax.random.normal(kb2[i], (hidden,), jnp.float32) for i in range(N)]),
        "g2": jnp.ones((N, hidden), jnp.float32),
        "be2": jnp.zeros((N, hidden), jnp.float32),
        # PyTorch init is a = 1e-8; use 0.5 here so the conv path is actually exercised.
        "a": jnp.full((N,), 0.5, jnp.float32),
    }
    return params, dil_list


# ----------------------------------------------------------------------------- pure-JAX reference (f32)


def _ref_causal_conv(x, w, b, dilation):
    K = w.shape[0]
    y = jax.lax.conv_general_dilated(
        x, w, window_strides=(1,), padding=[((K - 1) * dilation, 0)],
        rhs_dilation=(dilation,), dimension_numbers=("NWC", "WIO", "NWC"))
    return y + b[None, None, :]


def _ref_layernorm(x, g, be, eps=1e-8):
    mean = jnp.mean(x, -1, keepdims=True)
    c = x - mean
    var = jnp.mean(c * c, -1, keepdims=True)
    return c * jax.lax.rsqrt(var + eps) * g[None, None, :] + be[None, None, :]


def ref_forward(x, params, dil_list, K=3):
    h = x @ params["proj_w"] + params["proj_b"]
    for n, d in enumerate(dil_list):
        h1 = jax.nn.relu(_ref_layernorm(
            _ref_causal_conv(h, params["w1"][n], params["b1"][n], d),
            params["g1"][n], params["be1"][n]))
        h2 = jax.nn.relu(_ref_layernorm(
            _ref_causal_conv(h1, params["w2"][n], params["b2"][n], 2 * d),
            params["g2"][n], params["be2"][n]))
        h = params["a"][n] * h2 + h
    return h @ params["out_w"] + params["out_b"]


# ----------------------------------------------------------------------------- main


if __name__ == "__main__":
    # C = 128 (lane-dense channels), T multiple of 8, small batch.
    B, T, FEAT, HIDDEN = 2, 32, 8, 128
    BLOCK_NUM, DILATIONS, K = 1, [1, 4], 3

    params, dil_list = init_params(jax.random.PRNGKey(0), FEAT, HIDDEN, BLOCK_NUM, DILATIONS, K)
    x = jax.random.normal(jax.random.PRNGKey(0), (B, T, FEAT), jnp.float32)

    out = jax.block_until_ready(encoder_forward(x, params, dil_list, K))
    ref = jax.block_until_ready(ref_forward(x, params, dil_list, K))

    assert out.shape == (B, T, HIDDEN)
    max_err = float(jnp.max(jnp.abs(out - ref)))
    # Kernel uses bf16 MXU inputs vs. a pure-f32 reference -> allow a few % drift.
    assert jnp.allclose(out, ref, atol=7e-2, rtol=7e-2), max_err

    print("KERNEL_OK")
</pallas_src>

<mosaic_0001>
module attributes {stable_mosaic.version = 11 : i64} {
  func.func @_encoder_kernel(%arg0: i32, %arg1: memref<2xf32, #tpu.memory_space<smem>>, %arg2: memref<1x32x8xbf16, #tpu.memory_space<vmem>>, %arg3: memref<8x128xbf16, #tpu.memory_space<vmem>>, %arg4: memref<1x128xf32, #tpu.memory_space<vmem>>, %arg5: memref<2x384x128xbf16, #tpu.memory_space<vmem>>, %arg6: memref<2x128xf32, #tpu.memory_space<vmem>>, %arg7: memref<2x128xf32, #tpu.memory_space<vmem>>, %arg8: memref<2x128xf32, #tpu.memory_space<vmem>>, %arg9: memref<2x384x128xbf16, #tpu.memory_space<vmem>>, %arg10: memref<2x128xf32, #tpu.memory_space<vmem>>, %arg11: memref<2x128xf32, #tpu.memory_space<vmem>>, %arg12: memref<2x128xf32, #tpu.memory_space<vmem>>, %arg13: memref<128x128xbf16, #tpu.memory_space<vmem>>, %arg14: memref<1x128xf32, #tpu.memory_space<vmem>>, %arg15: memref<1x32x128xf32, #tpu.memory_space<vmem>>, %arg16: memref<48x128xf32, #tpu.memory_space<vmem>>) attributes {dimension_semantics = [#tpu.dimension_semantics<parallel>], iteration_bounds = array<i64: 2>, scalar_prefetch = 1 : i64, scratch_operands = 1 : i64, tpu.core_type = #tpu.core_type<tc>, window_params = [{transform_indices = @transform_0, window_bounds = array<i64: 1, 32, 8>}, {pipeline_mode = #tpu.pipeline_mode<synchronous>, transform_indices = @transform_1, window_bounds = array<i64: 8, 128>}, {pipeline_mode = #tpu.pipeline_mode<synchronous>, transform_indices = @transform_2, window_bounds = array<i64: 1, 128>}, {pipeline_mode = #tpu.pipeline_mode<synchronous>, transform_indices = @transform_3, window_bounds = array<i64: 2, 384, 128>}, {pipeline_mode = #tpu.pipeline_mode<synchronous>, transform_indices = @transform_4, window_bounds = array<i64: 2, 128>}, {pipeline_mode = #tpu.pipeline_mode<synchronous>, transform_indices = @transform_5, window_bounds = array<i64: 2, 128>}, {pipeline_mode = #tpu.pipeline_mode<synchronous>, transform_indices = @transform_6, window_bounds = array<i64: 2, 128>}, {pipeline_mode = #tpu.pipeline_mode<synchronous>, transform_indices = @transform_7, window_bounds = array<i64: 2, 384, 128>}, {pipeline_mode = #tpu.pipeline_mode<synchronous>, transform_indices = @transform_8, window_bounds = array<i64: 2, 128>}, {pipeline_mode = #tpu.pipeline_mode<synchronous>, transform_indices = @transform_9, window_bounds = array<i64: 2, 128>}, {pipeline_mode = #tpu.pipeline_mode<synchronous>, transform_indices = @transform_10, window_bounds = array<i64: 2, 128>}, {pipeline_mode = #tpu.pipeline_mode<synchronous>, transform_indices = @transform_11, window_bounds = array<i64: 128, 128>}, {pipeline_mode = #tpu.pipeline_mode<synchronous>, transform_indices = @transform_12, window_bounds = array<i64: 1, 128>}, {transform_indices = @transform_13, window_bounds = array<i64: 1, 32, 128>}]} {
    %cst = arith.constant 0.000000e+00 : f32
    %0 = vector.broadcast %cst : f32 to vector<16x128xf32>
    %c0 = arith.constant 0 : index
    %c0_0 = arith.constant 0 : index
    %1 = vector.load %arg16[%c0, %c0_0] : memref<48x128xf32, #tpu.memory_space<vmem>>, vector<16x128xf32>
    tpu.vector_store %arg16[%c0, %c0_0], %0 {strides = array<i32>} : memref<48x128xf32, #tpu.memory_space<vmem>>, vector<16x128xf32>,
    %c0_1 = arith.constant 0 : index
    %c0_2 = arith.constant 0 : index
    %c0_3 = arith.constant 0 : index
    %2 = vector.load %arg2[%c0_1, %c0_2, %c0_3] : memref<1x32x8xbf16, #tpu.memory_space<vmem>>, vector<1x32x8xbf16>
    %3 = vector.shape_cast %2 : vector<1x32x8xbf16> to vector<32x8xbf16>
    %c0_4 = arith.constant 0 : index
    %c0_5 = arith.constant 0 : index
    %4 = vector.load %arg3[%c0_4, %c0_5] : memref<8x128xbf16, #tpu.memory_space<vmem>>, vector<8x128xbf16>
    %cst_6 = arith.constant dense<0.000000e+00> : vector<32x128xf32>
    %5 = tpu.matmul %3, %4, %cst_6 {dimension_numbers = #tpu.dot_dimension_numbers<[1], [0], [0], [1], [0, 0, 1, 1], [], []>} : vector<32x8xbf16>, vector<8x128xbf16>, vector<32x128xf32> -> vector<32x128xf32>
    %c0_7 = arith.constant 0 : index
    %c0_8 = arith.constant 0 : index
    %6 = vector.load %arg4[%c0_7, %c0_8] : memref<1x128xf32, #tpu.memory_space<vmem>>, vector<1x128xf32>
    %7 = vector.broadcast %6 : vector<1x128xf32> to vector<32x128xf32>
    %8 = arith.addf %5, %7 : vector<32x128xf32>
    %c16 = arith.constant 16 : index
    %c0_9 = arith.constant 0 : index
    %9 = vector.load %arg16[%c16, %c0_9] : memref<48x128xf32, #tpu.memory_space<vmem>>, vector<32x128xf32>
    tpu.vector_store %arg16[%c16, %c0_9], %8 {strides = array<i32>} : memref<48x128xf32, #tpu.memory_space<vmem>>, vector<32x128xf32>,
    %c14 = arith.constant 14 : index
    %c0_10 = arith.constant 0 : index
    %10 = vector.load %arg16[%c14, %c0_10] : memref<48x128xf32, #tpu.memory_space<vmem>>, vector<32x128xf32>
    %c15 = arith.constant 15 : index
    %c0_11 = arith.constant 0 : index
    %11 = vector.load %arg16[%c15, %c0_11] : memref<48x128xf32, #tpu.memory_space<vmem>>, vector<32x128xf32>
    %c16_12 = arith.constant 16 : index
    %c0_13 = arith.constant 0 : index
    %12 = vector.load %arg16[%c16_12, %c0_13] : memref<48x128xf32, #tpu.memory_space<vmem>>, vector<32x128xf32>
    %13 = tpu.concatenate %10, %11, %12 in 1 : vector<32x128xf32>, vector<32x128xf32>, vector<32x128xf32> -> vector<32x384xf32>
    %14 = arith.truncf %13 : vector<32x384xf32> to vector<32x384xbf16>
    %c0_14 = arith.constant 0 : index
    %c0_15 = arith.constant 0 : index
    %c0_16 = arith.constant 0 : index
    %15 = vector.load %arg5[%c0_14, %c0_15, %c0_16] : memref<2x384x128xbf16, #tpu.memory_space<vmem>>, vector<1x384x128xbf16>
    %16 = vector.shape_cast %15 : vector<1x384x128xbf16> to vector<384x128xbf16>
    %cst_17 = arith.constant dense<0.000000e+00> : vector<32x128xf32>
    %17 = tpu.matmul %14, %16, %cst_17 {dimension_numbers = #tpu.dot_dimension_numbers<[1], [0], [0], [1], [0, 0, 1, 1], [], []>} : vector<32x384xbf16>, vector<384x128xbf16>, vector<32x128xf32> -> vector<32x128xf32>
    %c0_18 = arith.constant 0 : index
    %c0_19 = arith.constant 0 : index
    %18 = vector.load %arg6[%c0_18, %c0_19] : memref<2x128xf32, #tpu.memory_space<vmem>>, vector<1x128xf32>
    %19 = vector.broadcast %18 : vector<1x128xf32> to vector<32x128xf32>
    %20 = arith.addf %17, %19 : vector<32x128xf32>
    %cst_20 = arith.constant dense<0.000000e+00> : vector<32xf32>
    %21 = vector.multi_reduction <add>, %20, %cst_20 [1] : vector<32x128xf32> to vector<32xf32>
    %22 = vector.shape_cast %21 : vector<32xf32> to vector<32x1xf32>
    %cst_21 = arith.constant 1.280000e+02 : f32
    %23 = vector.broadcast %cst_21 : f32 to vector<32x1xf32>
    %24 = arith.divf %22, %23 : vector<32x1xf32>
    %25 = vector.broadcast %24 : vector<32x1xf32> to vector<32x128xf32>
    %26 = arith.subf %20, %25 : vector<32x128xf32>
    %27 = arith.mulf %26, %26 : vector<32x128xf32>
    %cst_22 = arith.constant dense<0.000000e+00> : vector<32xf32>
    %28 = vector.multi_reduction <add>, %27, %cst_22 [1] : vector<32x128xf32> to vector<32xf32>
    %29 = vector.shape_cast %28 : vector<32xf32> to vector<32x1xf32>
    %cst_23 = arith.constant 1.280000e+02 : f32
    %30 = vector.broadcast %cst_23 : f32 to vector<32x1xf32>
    %31 = arith.divf %29, %30 : vector<32x1xf32>
    %cst_24 = arith.constant 9.99999993E-9 : f32
    %32 = vector.broadcast %cst_24 : f32 to vector<32x1xf32>
    %33 = arith.addf %31, %32 : vector<32x1xf32>
    %34 = math.rsqrt %33 : vector<32x1xf32>
    %35 = vector.broadcast %34 : vector<32x1xf32> to vector<32x128xf32>
    %36 = arith.mulf %26, %35 : vector<32x128xf32>
    %c0_25 = arith.constant 0 : index
    %c0_26 = arith.constant 0 : index
    %37 = vector.load %arg7[%c0_25, %c0_26] : memref<2x128xf32, #tpu.memory_space<vmem>>, vector<1x128xf32>
    %38 = vector.broadcast %37 : vector<1x128xf32> to vector<32x128xf32>
    %39 = arith.mulf %36, %38 : vector<32x128xf32>
    %c0_27 = arith.constant 0 : index
    %c0_28 = arith.constant 0 : index
    %40 = vector.load %arg8[%c0_27, %c0_28] : memref<2x128xf32, #tpu.memory_space<vmem>>, vector<1x128xf32>
    %41 = vector.broadcast %40 : vector<1x128xf32> to vector<32x128xf32>
    %42 = arith.addf %39, %41 : vector<32x128xf32>
    %cst_29 = arith.constant 0.000000e+00 : f32
    %43 = vector.broadcast %cst_29 : f32 to vector<32x128xf32>
    %44 = arith.maximumf %42, %43 : vector<32x128xf32>
    %c16_30 = arith.constant 16 : index
    %c0_31 = arith.constant 0 : index
    %45 = vector.load %arg16[%c16_30, %c0_31] : memref<48x128xf32, #tpu.memory_space<vmem>>, vector<32x128xf32>
    tpu.vector_store %arg16[%c16_30, %c0_31], %44 {strides = array<i32>} : memref<48x128xf32, #tpu.memory_space<vmem>>, vector<32x128xf32>,
    %c12 = arith.constant 12 : index
    %c0_32 = arith.constant 0 : index
    %46 = vector.load %arg16[%c12, %c0_32] : memref<48x128xf32, #tpu.memory_space<vmem>>, vector<32x128xf32>
    %c14_33 = arith.constant 14 : index
    %c0_34 = arith.constant 0 : index
    %47 = vector.load %arg16[%c14_33, %c0_34] : memref<48x128xf32, #tpu.memory_space<vmem>>, vector<32x128xf32>
    %c16_35 = arith.constant 16 : index
    %c0_36 = arith.constant 0 : index
    %48 = vector.load %arg16[%c16_35, %c0_36] : memref<48x128xf32, #tpu.memory_space<vmem>>, vector<32x128xf32>
    %49 = tpu.concatenate %46, %47, %48 in 1 : vector<32x128xf32>, vector<32x128xf32>, vector<32x128xf32> -> vector<32x384xf32>
    %50 = arith.truncf %49 : vector<32x384xf32> to vector<32x384xbf16>
    %c0_37 = arith.constant 0 : index
    %c0_38 = arith.constant 0 : index
    %c0_39 = arith.constant 0 : index
    %51 = vector.load %arg9[%c0_37, %c0_38, %c0_39] : memref<2x384x128xbf16, #tpu.memory_space<vmem>>, vector<1x384x128xbf16>
    %52 = vector.shape_cast %51 : vector<1x384x128xbf16> to vector<384x128xbf16>
    %cst_40 = arith.constant dense<0.000000e+00> : vector<32x128xf32>
    %53 = tpu.matmul %50, %52, %cst_40 {dimension_numbers = #tpu.dot_dimension_numbers<[1], [0], [0], [1], [0, 0, 1, 1], [], []>} : vector<32x384xbf16>, vector<384x128xbf16>, vector<32x128xf32> -> vector<32x128xf32>
    %c0_41 = arith.constant 0 : index
    %c0_42 = arith.constant 0 : index
    %54 = vector.load %arg10[%c0_41, %c0_42] : memref<2x128xf32, #tpu.memory_space<vmem>>, vector<1x128xf32>
    %55 = vector.broadcast %54 : vector<1x128xf32> to vector<32x128xf32>
    %56 = arith.addf %53, %55 : vector<32x128xf32>
    %cst_43 = arith.constant dense<0.000000e+00> : vector<32xf32>
    %57 = vector.multi_reduction <add>, %56, %cst_43 [1] : vector<32x128xf32> to vector<32xf32>
    %58 = vector.shape_cast %57 : vector<32xf32> to vector<32x1xf32>
    %cst_44 = arith.constant 1.280000e+02 : f32
    %59 = vector.broadcast %cst_44 : f32 to vector<32x1xf32>
    %60 = arith.divf %58, %59 : vector<32x1xf32>
    %61 = vector.broadcast %60 : vector<32x1xf32> to vector<32x128xf32>
    %62 = arith.subf %56, %61 : vector<32x128xf32>
    %63 = arith.mulf %62, %62 : vector<32x128xf32>
    %cst_45 = arith.constant dense<0.000000e+00> : vector<32xf32>
    %64 = vector.multi_reduction <add>, %63, %cst_45 [1] : vector<32x128xf32> to vector<32xf32>
    %65 = vector.shape_cast %64 : vector<32xf32> to vector<32x1xf32>
    %cst_46 = arith.constant 1.280000e+02 : f32
    %66 = vector.broadcast %cst_46 : f32 to vector<32x1xf32>
    %67 = arith.divf %65, %66 : vector<32x1xf32>
    %cst_47 = arith.constant 9.99999993E-9 : f32
    %68 = vector.broadcast %cst_47 : f32 to vector<32x1xf32>
    %69 = arith.addf %67, %68 : vector<32x1xf32>
    %70 = math.rsqrt %69 : vector<32x1xf32>
    %71 = vector.broadcast %70 : vector<32x1xf32> to vector<32x128xf32>
    %72 = arith.mulf %62, %71 : vector<32x128xf32>
    %c0_48 = arith.constant 0 : index
    %c0_49 = arith.constant 0 : index
    %73 = vector.load %arg11[%c0_48, %c0_49] : memref<2x128xf32, #tpu.memory_space<vmem>>, vector<1x128xf32>
    %74 = vector.broadcast %73 : vector<1x128xf32> to vector<32x128xf32>
    %75 = arith.mulf %72, %74 : vector<32x128xf32>
    %c0_50 = arith.constant 0 : index
    %c0_51 = arith.constant 0 : index
    %76 = vector.load %arg12[%c0_50, %c0_51] : memref<2x128xf32, #tpu.memory_space<vmem>>, vector<1x128xf32>
    %77 = vector.broadcast %76 : vector<1x128xf32> to vector<32x128xf32>
    %78 = arith.addf %75, %77 : vector<32x128xf32>
    %cst_52 = arith.constant 0.000000e+00 : f32
    %79 = vector.broadcast %cst_52 : f32 to vector<32x128xf32>
    %80 = arith.maximumf %78, %79 : vector<32x128xf32>
    %c0_53 = arith.constant 0 : index
    %81 = memref.load %arg1[%c0_53] : memref<2xf32, #tpu.memory_space<smem>>
    %82 = vector.broadcast %81 : f32 to vector<32x128xf32>
    %83 = arith.mulf %82, %80 : vector<32x128xf32>
    %84 = arith.addf %83, %8 : vector<32x128xf32>
    %c16_54 = arith.constant 16 : index
    %c0_55 = arith.constant 0 : index
    %85 = vector.load %arg16[%c16_54, %c0_55] : memref<48x128xf32, #tpu.memory_space<vmem>>, vector<32x128xf32>
    tpu.vector_store %arg16[%c16_54, %c0_55], %84 {strides = array<i32>} : memref<48x128xf32, #tpu.memory_space<vmem>>, vector<32x128xf32>,
    %c8 = arith.constant 8 : index
    %c0_56 = arith.constant 0 : index
    %86 = vector.load %arg16[%c8, %c0_56] : memref<48x128xf32, #tpu.memory_space<vmem>>, vector<32x128xf32>
    %c12_57 = arith.constant 12 : index
    %c0_58 = arith.constant 0 : index
    %87 = vector.load %arg16[%c12_57, %c0_58] : memref<48x128xf32, #tpu.memory_space<vmem>>, vector<32x128xf32>
    %c16_59 = arith.constant 16 : index
    %c0_60 = arith.constant 0 : index
    %88 = vector.load %arg16[%c16_59, %c0_60] : memref<48x128xf32, #tpu.memory_space<vmem>>, vector<32x128xf32>
    %89 = tpu.concatenate %86, %87, %88 in 1 : vector<32x128xf32>, vector<32x128xf32>, vector<32x128xf32> -> vector<32x384xf32>
    %90 = arith.truncf %89 : vector<32x384xf32> to vector<32x384xbf16>
    %c1 = arith.constant 1 : index
    %c0_61 = arith.constant 0 : index
    %c0_62 = arith.constant 0 : index
    %91 = vector.load %arg5[%c1, %c0_61, %c0_62] : memref<2x384x128xbf16, #tpu.memory_space<vmem>>, vector<1x384x128xbf16>
    %92 = vector.shape_cast %91 : vector<1x384x128xbf16> to vector<384x128xbf16>
    %cst_63 = arith.constant dense<0.000000e+00> : vector<32x128xf32>
    %93 = tpu.matmul %90, %92, %cst_63 {dimension_numbers = #tpu.dot_dimension_numbers<[1], [0], [0], [1], [0, 0, 1, 1], [], []>} : vector<32x384xbf16>, vector<384x128xbf16>, vector<32x128xf32> -> vector<32x128xf32>
    %c1_64 = arith.constant 1 : index
    %c0_65 = arith.constant 0 : index
    %94 = vector.load %arg6[%c1_64, %c0_65] : memref<2x128xf32, #tpu.memory_space<vmem>>, vector<1x128xf32>
    %95 = vector.broadcast %94 : vector<1x128xf32> to vector<32x128xf32>
    %96 = arith.addf %93, %95 : vector<32x128xf32>
    %cst_66 = arith.constant dense<0.000000e+00> : vector<32xf32>
    %97 = vector.multi_reduction <add>, %96, %cst_66 [1] : vector<32x128xf32> to vector<32xf32>
    %98 = vector.shape_cast %97 : vector<32xf32> to vector<32x1xf32>
    %cst_67 = arith.constant 1.280000e+02 : f32
    %99 = vector.broadcast %cst_67 : f32 to vector<32x1xf32>
    %100 = arith.divf %98, %99 : vector<32x1xf32>
    %101 = vector.broadcast %100 : vector<32x1xf32> to vector<32x128xf32>
    %102 = arith.subf %96, %101 : vector<32x128xf32>
    %103 = arith.mulf %102, %102 : vector<32x128xf32>
    %cst_68 = arith.constant dense<0.000000e+00> : vector<32xf32>
    %104 = vector.multi_reduction <add>, %103, %cst_68 [1] : vector<32x128xf32> to vector<32xf32>
    %105 = vector.shape_cast %104 : vector<32xf32> to vector<32x1xf32>
    %cst_69 = arith.constant 1.280000e+02 : f32
    %106 = vector.broadcast %cst_69 : f32 to vector<32x1xf32>
    %107 = arith.divf %105, %106 : vector<32x1xf32>
    %cst_70 = arith.constant 9.99999993E-9 : f32
    %108 = vector.broadcast %cst_70 : f32 to vector<32x1xf32>
    %109 = arith.addf %107, %108 : vector<32x1xf32>
    %110 = math.rsqrt %109 : vector<32x1xf32>
    %111 = vector.broadcast %110 : vector<32x1xf32> to vector<32x128xf32>
    %112 = arith.mulf %102, %111 : vector<32x128xf32>
    %c1_71 = arith.constant 1 : index
    %c0_72 = arith.constant 0 : index
    %113 = vector.load %arg7[%c1_71, %c0_72] : memref<2x128xf32, #tpu.memory_space<vmem>>, vector<1x128xf32>
    %114 = vector.broadcast %113 : vector<1x128xf32> to vector<32x128xf32>
    %115 = arith.mulf %112, %114 : vector<32x128xf32>
    %c1_73 = arith.constant 1 : index
    %c0_74 = arith.constant 0 : index
    %116 = vector.load %arg8[%c1_73, %c0_74] : memref<2x128xf32, #tpu.memory_space<vmem>>, vector<1x128xf32>
    %117 = vector.broadcast %116 : vector<1x128xf32> to vector<32x128xf32>
    %118 = arith.addf %115, %117 : vector<32x128xf32>
    %cst_75 = arith.constant 0.000000e+00 : f32
    %119 = vector.broadcast %cst_75 : f32 to vector<32x128xf32>
    %120 = arith.maximumf %118, %119 : vector<32x128xf32>
    %c16_76 = arith.constant 16 : index
    %c0_77 = arith.constant 0 : index
    %121 = vector.load %arg16[%c16_76, %c0_77] : memref<48x128xf32, #tpu.memory_space<vmem>>, vector<32x128xf32>
    tpu.vector_store %arg16[%c16_76, %c0_77], %120 {strides = array<i32>} : memref<48x128xf32, #tpu.memory_space<vmem>>, vector<32x128xf32>,
    %c0_78 = arith.constant 0 : index
    %c0_79 = arith.constant 0 : index
    %122 = vector.load %arg16[%c0_78, %c0_79] : memref<48x128xf32, #tpu.memory_space<vmem>>, vector<32x128xf32>
    %c8_80 = arith.constant 8 : index
    %c0_81 = arith.constant 0 : index
    %123 = vector.load %arg16[%c8_80, %c0_81] : memref<48x128xf32, #tpu.memory_space<vmem>>, vector<32x128xf32>
    %c16_82 = arith.constant 16 : index
    %c0_83 = arith.constant 0 : index
    %124 = vector.load %arg16[%c16_82, %c0_83] : memref<48x128xf32, #tpu.memory_space<vmem>>, vector<32x128xf32>
    %125 = tpu.concatenate %122, %123, %124 in 1 : vector<32x128xf32>, vector<32x128xf32>, vector<32x128xf32> -> vector<32x384xf32>
    %126 = arith.truncf %125 : vector<32x384xf32> to vector<32x384xbf16>
    %c1_84 = arith.constant 1 : index
    %c0_85 = arith.constant 0 : index
    %c0_86 = arith.constant 0 : index
    %127 = vector.load %arg9[%c1_84, %c0_85, %c0_86] : memref<2x384x128xbf16, #tpu.memory_space<vmem>>, vector<1x384x128xbf16>
    %128 = vector.shape_cast %127 : vector<1x384x128xbf16> to vector<384x128xbf16>
    %cst_87 = arith.constant dense<0.000000e+00> : vector<32x128xf32>
    %129 = tpu.matmul %126, %128, %cst_87 {dimension_numbers = #tpu.dot_dimension_numbers<[1], [0], [0], [1], [0, 0, 1, 1], [], []>} : vector<32x384xbf16>, vector<384x128xbf16>, vector<32x128xf32> -> vector<32x128xf32>
    %c1_88 = arith.constant 1 : index
    %c0_89 = arith.constant 0 : index
    %130 = vector.load %arg10[%c1_88, %c0_89] : memref<2x128xf32, #tpu.memory_space<vmem>>, vector<1x128xf32>
    %131 = vector.broadcast %130 : vector<1x128xf32> to vector<32x128xf32>
    %132 = arith.addf %129, %131 : vector<32x128xf32>
    %cst_90 = arith.constant dense<0.000000e+00> : vector<32xf32>
    %133 = vector.multi_reduction <add>, %132, %cst_90 [1] : vector<32x128xf32> to vector<32xf32>
    %134 = vector.shape_cast %133 : vector<32xf32> to vector<32x1xf32>
    %cst_91 = arith.constant 1.280000e+02 : f32
    %135 = vector.broadcast %cst_91 : f32 to vector<32x1xf32>
    %136 = arith.divf %134, %135 : vector<32x1xf32>
    %137 = vector.broadcast %136 : vector<32x1xf32> to vector<32x128xf32>
    %138 = arith.subf %132, %137 : vector<32x128xf32>
    %139 = arith.mulf %138, %138 : vector<32x128xf32>
    %cst_92 = arith.constant dense<0.000000e+00> : vector<32xf32>
    %140 = vector.multi_reduction <add>, %139, %cst_92 [1] : vector<32x128xf32> to vector<32xf32>
    %141 = vector.shape_cast %140 : vector<32xf32> to vector<32x1xf32>
    %cst_93 = arith.constant 1.280000e+02 : f32
    %142 = vector.broadcast %cst_93 : f32 to vector<32x1xf32>
    %143 = arith.divf %141, %142 : vector<32x1xf32>
    %cst_94 = arith.constant 9.99999993E-9 : f32
    %144 = vector.broadcast %cst_94 : f32 to vector<32x1xf32>
    %145 = arith.addf %143, %144 : vector<32x1xf32>
    %146 = math.rsqrt %145 : vector<32x1xf32>
    %147 = vector.broadcast %146 : vector<32x1xf32> to vector<32x128xf32>
    %148 = arith.mulf %138, %147 : vector<32x128xf32>
    %c1_95 = arith.constant 1 : index
    %c0_96 = arith.constant 0 : index
    %149 = vector.load %arg11[%c1_95, %c0_96] : memref<2x128xf32, #tpu.memory_space<vmem>>, vector<1x128xf32>
    %150 = vector.broadcast %149 : vector<1x128xf32> to vector<32x128xf32>
    %151 = arith.mulf %148, %150 : vector<32x128xf32>
    %c1_97 = arith.constant 1 : index
    %c0_98 = arith.constant 0 : index
    %152 = vector.load %arg12[%c1_97, %c0_98] : memref<2x128xf32, #tpu.memory_space<vmem>>, vector<1x128xf32>
    %153 = vector.broadcast %152 : vector<1x128xf32> to vector<32x128xf32>
    %154 = arith.addf %151, %153 : vector<32x128xf32>
    %cst_99 = arith.constant 0.000000e+00 : f32
    %155 = vector.broadcast %cst_99 : f32 to vector<32x128xf32>
    %156 = arith.maximumf %154, %155 : vector<32x128xf32>
    %c1_100 = arith.constant 1 : index
    %157 = memref.load %arg1[%c1_100] : memref<2xf32, #tpu.memory_space<smem>>
    %158 = vector.broadcast %157 : f32 to vector<32x128xf32>
    %159 = arith.mulf %158, %156 : vector<32x128xf32>
    %160 = arith.addf %159, %84 : vector<32x128xf32>
    %161 = arith.truncf %160 : vector<32x128xf32> to vector<32x128xbf16>
    %c0_101 = arith.constant 0 : index
    %c0_102 = arith.constant 0 : index
    %162 = vector.load %arg13[%c0_101, %c0_102] : memref<128x128xbf16, #tpu.memory_space<vmem>>, vector<128x128xbf16>
    %cst_103 = arith.constant dense<0.000000e+00> : vector<32x128xf32>
    %163 = tpu.matmul %161, %162, %cst_103 {dimension_numbers = #tpu.dot_dimension_numbers<[1], [0], [0], [1], [0, 0, 1, 1], [], []>} : vector<32x128xbf16>, vector<128x128xbf16>, vector<32x128xf32> -> vector<32x128xf32>
    %c0_104 = arith.constant 0 : index
    %c0_105 = arith.constant 0 : index
    %164 = vector.load %arg14[%c0_104, %c0_105] : memref<1x128xf32, #tpu.memory_space<vmem>>, vector<1x128xf32>
    %165 = vector.broadcast %164 : vector<1x128xf32> to vector<32x128xf32>
    %166 = arith.addf %163, %165 : vector<32x128xf32>
    %c0_106 = arith.constant 0 : index
    %c0_107 = arith.constant 0 : index
    %c0_108 = arith.constant 0 : index
    %167 = vector.load %arg15[%c0_106, %c0_107, %c0_108] : memref<1x32x128xf32, #tpu.memory_space<vmem>>, vector<1x32x128xf32>
    %168 = vector.shape_cast %167 : vector<1x32x128xf32> to vector<32x128xf32>
    %169 = vector.shape_cast %166 : vector<32x128xf32> to vector<1x32x128xf32>
    tpu.vector_store %arg15[%c0_106, %c0_107, %c0_108], %169 {strides = array<i32>} : memref<1x32x128xf32, #tpu.memory_space<vmem>>, vector<1x32x128xf32>,
    return
  }
  func.func @transform_0(%arg0: i32, %arg1: memref<2xf32, #tpu.memory_space<smem>>) -> (i32, i32, i32) {
    %c0_i32 = arith.constant 0 : i32
    %c0_i32_0 = arith.constant 0 : i32
    %c0_i32_1 = arith.constant 0 : i32
    return %arg0, %c0_i32, %c0_i32_0 : i32, i32, i32
  }
  func.func @transform_1(%arg0: i32, %arg1: memref<2xf32, #tpu.memory_space<smem>>) -> (i32, i32) {
    %c0_i32 = arith.constant 0 : i32
    %c0_i32_0 = arith.constant 0 : i32
    %c0_i32_1 = arith.constant 0 : i32
    return %c0_i32, %c0_i32_0 : i32, i32
  }
  func.func @transform_2(%arg0: i32, %arg1: memref<2xf32, #tpu.memory_space<smem>>) -> (i32, i32) {
    %c0_i32 = arith.constant 0 : i32
    %c0_i32_0 = arith.constant 0 : i32
    %c0_i32_1 = arith.constant 0 : i32
    return %c0_i32, %c0_i32_0 : i32, i32
  }
  func.func @transform_3(%arg0: i32, %arg1: memref<2xf32, #tpu.memory_space<smem>>) -> (i32, i32, i32) {
    %c0_i32 = arith.constant 0 : i32
    %c0_i32_0 = arith.constant 0 : i32
    %c0_i32_1 = arith.constant 0 : i32
    %c0_i32_2 = arith.constant 0 : i32
    return %c0_i32, %c0_i32_0, %c0_i32_1 : i32, i32, i32
  }
  func.func @transform_4(%arg0: i32, %arg1: memref<2xf32, #tpu.memory_space<smem>>) -> (i32, i32) {
    %c0_i32 = arith.constant 0 : i32
    %c0_i32_0 = arith.constant 0 : i32
    %c0_i32_1 = arith.constant 0 : i32
    return %c0_i32, %c0_i32_0 : i32, i32
  }
  func.func @transform_5(%arg0: i32, %arg1: memref<2xf32, #tpu.memory_space<smem>>) -> (i32, i32) {
    %c0_i32 = arith.constant 0 : i32
    %c0_i32_0 = arith.constant 0 : i32
    %c0_i32_1 = arith.constant 0 : i32
    return %c0_i32, %c0_i32_0 : i32, i32
  }
  func.func @transform_6(%arg0: i32, %arg1: memref<2xf32, #tpu.memory_space<smem>>) -> (i32, i32) {
    %c0_i32 = arith.constant 0 : i32
    %c0_i32_0 = arith.constant 0 : i32
    %c0_i32_1 = arith.constant 0 : i32
    return %c0_i32, %c0_i32_0 : i32, i32
  }
  func.func @transform_7(%arg0: i32, %arg1: memref<2xf32, #tpu.memory_space<smem>>) -> (i32, i32, i32) {
    %c0_i32 = arith.constant 0 : i32
    %c0_i32_0 = arith.constant 0 : i32
    %c0_i32_1 = arith.constant 0 : i32
    %c0_i32_2 = arith.constant 0 : i32
    return %c0_i32, %c0_i32_0, %c0_i32_1 : i32, i32, i32
  }
  func.func @transform_8(%arg0: i32, %arg1: memref<2xf32, #tpu.memory_space<smem>>) -> (i32, i32) {
    %c0_i32 = arith.constant 0 : i32
    %c0_i32_0 = arith.constant 0 : i32
    %c0_i32_1 = arith.constant 0 : i32
    return %c0_i32, %c0_i32_0 : i32, i32
  }
  func.func @transform_9(%arg0: i32, %arg1: memref<2xf32, #tpu.memory_space<smem>>) -> (i32, i32) {
    %c0_i32 = arith.constant 0 : i32
    %c0_i32_0 = arith.constant 0 : i32
    %c0_i32_1 = arith.constant 0 : i32
    return %c0_i32, %c0_i32_0 : i32, i32
  }
  func.func @transform_10(%arg0: i32, %arg1: memref<2xf32, #tpu.memory_space<smem>>) -> (i32, i32) {
    %c0_i32 = arith.constant 0 : i32
    %c0_i32_0 = arith.constant 0 : i32
    %c0_i32_1 = arith.constant 0 : i32
    return %c0_i32, %c0_i32_0 : i32, i32
  }
  func.func @transform_11(%arg0: i32, %arg1: memref<2xf32, #tpu.memory_space<smem>>) -> (i32, i32) {
    %c0_i32 = arith.constant 0 : i32
    %c0_i32_0 = arith.constant 0 : i32
    %c0_i32_1 = arith.constant 0 : i32
    return %c0_i32, %c0_i32_0 : i32, i32
  }
  func.func @transform_12(%arg0: i32, %arg1: memref<2xf32, #tpu.memory_space<smem>>) -> (i32, i32) {
    %c0_i32 = arith.constant 0 : i32
    %c0_i32_0 = arith.constant 0 : i32
    %c0_i32_1 = arith.constant 0 : i32
    return %c0_i32, %c0_i32_0 : i32, i32
  }
  func.func @transform_13(%arg0: i32, %arg1: memref<2xf32, #tpu.memory_space<smem>>) -> (i32, i32, i32) {
    %c0_i32 = arith.constant 0 : i32
    %c0_i32_0 = arith.constant 0 : i32
    %c0_i32_1 = arith.constant 0 : i32
    return %arg0, %c0_i32, %c0_i32_0 : i32, i32, i32
  }
}

</mosaic_0001>

<llo_original>
// kernel: tpu_custom_call.1
$region0: #{tpu_custom_call.1}
  #allocation0 [shape = 'u32[]', space=smem, size = 0x4, offset = 0x4, fixed_abs, tag = 'smem constant byte address 0x4 - core index']
  #allocation1 [shape = 'u32[144,128]{1,0:T(1,128)}', space=vmem, size = 0x12000, scoped, tag = 'internal scratch']
  #allocation2 [shape = 'f32[48,128]{1,0:T(8,128)}', space=vmem, size = 0x6000, scoped, tag = 'scratch operand']
  #allocation3 [shape = 's32[1]{0}', space=sflag, size = 0x4, scoped, tag = 'scoped memory for tpu_custom_call.1']
  #allocation4 [shape = 'u8[512]{0}', space=smem, size = 0x200, scoped, tag = 'prefetched SMEM operand 0']
  %s0 = inlined_call_operand.vmem [shape: f32[2], index: 0, kind: input, shape index: {}]
  %s1 = inlined_call_operand.vmem [shape: bf16[2,32,8], index: 1, kind: input, shape index: {}]
  %s2 = inlined_call_operand.vmem [shape: bf16[8,128], index: 2, kind: input, shape index: {}]
  %s3 = inlined_call_operand.vmem [shape: f32[1,128], index: 3, kind: input, shape index: {}]
  %s4 = inlined_call_operand.hbm [shape: bf16[2,384,128], index: 4, kind: input, shape index: {}]
  %s5 = inlined_call_operand.vmem [shape: f32[2,128], index: 5, kind: input, shape index: {}]
  %s6 = inlined_call_operand.vmem [shape: f32[2,128], index: 6, kind: input, shape index: {}]
  %s7 = inlined_call_operand.vmem [shape: f32[2,128], index: 7, kind: input, shape index: {}]
  %s8 = inlined_call_operand.hbm [shape: bf16[2,384,128], index: 8, kind: input, shape index: {}]
  %s9 = inlined_call_operand.vmem [shape: f32[2,128], index: 9, kind: input, shape index: {}]
  %s10 = inlined_call_operand.vmem [shape: f32[2,128], index: 10, kind: input, shape index: {}]
  %s11 = inlined_call_operand.vmem [shape: f32[2,128], index: 11, kind: input, shape index: {}]
  %s12 = inlined_call_operand.hbm [shape: bf16[128,128], index: 12, kind: input, shape index: {}]
  %s13 = inlined_call_operand.vmem [shape: f32[1,128], index: 13, kind: input, shape index: {}]
  %s14 = inlined_call_operand.hbm [shape: f32[2,32,128], index: 14, kind: output, shape index: {}]
  %s15 = sld [smem:[#allocation0]]
  $region97: #{tpu_custom_call.1} parent=0
    _
  %s17 = ssub.s32 1, %s15
  %s18 = scalar_select 0, %s17, %s15
  %s19 = sshll.u32 %s0, 4
  %s20 = int_to_ptr.vmem [resolvable:$true] %s19
  %22 = dma.vmem_to_smem %s20, 16, [#allocation4], [#allocation3]
  %23 = dma.done [#allocation3], 16
  %24 = sfence
  $region1: #{tpu_custom_call.1} parent=0
    #allocation5 [shape = 'u8[196608]{0}', space=vmem, size = 0x30000, scoped, tag = 'input window, operand 4, single buffered']
    #allocation6 [shape = 's32[2]{0}', space=sflag, size = 0x8, scoped, tag = 'scoped memory for tpu_custom_call.1']
    #allocation7 [shape = 's32[2]{0}', space=sflag, size = 0x8, scoped, tag = 'scoped memory for tpu_custom_call.1']
    #allocation8 [shape = 'u8[196608]{0}', space=vmem, size = 0x30000, scoped, tag = 'input window, operand 8, single buffered']
    #allocation9 [shape = 's32[1]{0}', space=sflag, size = 0x4, scoped, tag = 'scoped memory for tpu_custom_call.1']
    #allocation10 [shape = 'u8[32768]{0}', space=vmem, size = 0x8000, scoped, tag = 'input window, operand 12, single buffered']
    #allocation11 [shape = 'u8[32768]{0}', space=vmem, size = 0x8000, scoped, tag = 'output window, operand 0']
    %25 = vsyncpa [#allocation6], 0
    %26 = vsyncpa [#allocation9], 0
    %27 = vsyncpa [#allocation7], 0
    %s28 = scalar_lea.sflag [#allocation7], 1
    %29 = vsyncpa %s28, 0
    loop: start=0, step=1, limit=4
    $region2: #{tpu_custom_call.1} parent=1 // loop_pre_header
      _
    $region3: #{tpu_custom_call.1} parent=1 // loop_header
      %s31 = sphi 0, %s35
      %p32 = scmp.ge.s32.totalorder %s31, 4
      %s41 = sphi 0, %s43
      %s44 = sphi 0, %s41
      %s45 = sphi 0, %s44
      %s61 = sphi 0, %s45
      %s65 = sphi 0, %s65
      %s67 = sphi 0, %s65
      %s68 = sphi 0, %s67
      %s82 = sphi 0, %s68
      %s86 = sphi 0, %s86
      %s88 = sphi 0, %s86
      %s89 = sphi 0, %s88
      %s103 = sphi 0, %s89
      %s107 = sphi 0, %s107
      %s109 = sphi 0, %s107
      %s110 = sphi 0, %s109
      %s124 = sphi 0, %s110
      %s128 = sphi 0, %s128
      %s130 = sphi 0, %s128
      %s131 = sphi 0, %s130
      %s145 = sphi 0, %s131
      %s149 = sphi 0, %s149
      %s151 = sphi 0, %s149
      %s152 = sphi 0, %s151
      %s166 = sphi 0, %s152
      %s170 = sphi 0, %s170
      %s172 = sphi 0, %s170
      %s173 = sphi 0, %s172
      %s187 = sphi 0, %s173
      %s191 = sphi 0, %s191
      %s193 = sphi 0, %s191
      %s194 = sphi 0, %s193
      %s208 = sphi 0, %s194
      %s212 = sphi 0, %s212
      %s214 = sphi 0, %s212
      %s215 = sphi 0, %s214
      %s229 = sphi 0, %s215
      %s233 = sphi 0, %s233
      %s235 = sphi 0, %s233
      %s236 = sphi 0, %s235
      %s250 = sphi 0, %s236
      %s254 = sphi 0, %s254
      %s256 = sphi 0, %s254
      %s257 = sphi 0, %s256
      %s271 = sphi 0, %s257
      %s275 = sphi 0, %s275
      %s277 = sphi 0, %s275
      %s278 = sphi 0, %s277
      %s292 = sphi 0, %s278
      %s296 = sphi 0, %s296
      %s298 = sphi 0, %s296
      %s299 = sphi 0, %s298
      %s313 = sphi 0, %s299
      %s319 = sphi 0, %s321
      %s322 = sphi 0, %s319
      %s323 = sphi 0, %s322
      %s339 = sphi 0, %s323
    $region4: #{tpu_custom_call.1} parent=1 // loop_header_branch
      %34 = sbr.rel (%p32) target = $region8
    $region5: #{tpu_custom_call.1} parent=1 // loop_body
      %s36 = ssub.s32 %s31, 1
      %s37 = ssub.s32 %s31, 2
      %s38 = sadd.s32 %s31, 1
      %s39 = ssub.s32 %s31, %s38
      %p40 = scmp.eq.s32.totalorder %s39, 0
      %s42 = sadd.s32 %s41, 1
      %s43 = scalar_select %p40, %s41, %s42
      %p46 = pneg %p40
      %p47 = scmp.eq.s32.totalorder %s31, 1
      %p48 = por %p46, %p47
      %p49 = scmp.ne.s32.totalorder %s41, %s44
      %p50 = scmp.eq.s32.totalorder %s31, 0
      %p51 = por %p49, %p50
      %p52 = scmp.ne.s32.totalorder %s41, %s44
      %p53 = scmp.eq.s32.totalorder %s36, 1
      %p54 = por %p52, %p53
      %p55 = scmp.ne.s32.totalorder %s44, %s45
      %p56 = scmp.eq.s32.totalorder %s36, 0
      %p57 = por %p55, %p56
      %p58 = scmp.ne.s32.totalorder %s44, %s45
      %p59 = scmp.eq.s32.totalorder %s37, 1
      %p60 = por %p58, %p59
      %p62 = scmp.ne.s32.totalorder %s45, %s61
      %p63 = scmp.eq.s32.totalorder %s37, 0
      %p64 = por %p62, %p63
      %s66 = sadd.s32 %s65, 1
      %p69 = scmp.eq.s32.totalorder %s31, 1
      %p70 = scmp.ne.s32.totalorder %s65, %s67
      %p71 = scmp.eq.s32.totalorder %s31, 0
      %p72 = por %p70, %p71
      %p73 = scmp.ne.s32.totalorder %s65, %s67
      %p74 = scmp.eq.s32.totalorder %s36, 1
      %p75 = por %p73, %p74
      %p76 = scmp.ne.s32.totalorder %s67, %s68
      %p77 = scmp.eq.s32.totalorder %s36, 0
      %p78 = por %p76, %p77
      %p79 = scmp.ne.s32.totalorder %s67, %s68
      %p80 = scmp.eq.s32.totalorder %s37, 1
      %p81 = por %p79, %p80
      %p83 = scmp.ne.s32.totalorder %s68, %s82
      %p84 = scmp.eq.s32.totalorder %s37, 0
      %p85 = por %p83, %p84
      %s87 = sadd.s32 %s86, 1
      %p90 = scmp.eq.s32.totalorder %s31, 1
      %p91 = scmp.ne.s32.totalorder %s86, %s88
      %p92 = scmp.eq.s32.totalorder %s31, 0
      %p93 = por %p91, %p92
      %p94 = scmp.ne.s32.totalorder %s86, %s88
      %p95 = scmp.eq.s32.totalorder %s36, 1
      %p96 = por %p94, %p95
      %p97 = scmp.ne.s32.totalorder %s88, %s89
      %p98 = scmp.eq.s32.totalorder %s36, 0
      %p99 = por %p97, %p98
      %p100 = scmp.ne.s32.totalorder %s88, %s89
      %p101 = scmp.eq.s32.totalorder %s37, 1
      %p102 = por %p100, %p101
      %p104 = scmp.ne.s32.totalorder %s89, %s103
      %p105 = scmp.eq.s32.totalorder %s37, 0
      %p106 = por %p104, %p105
      %s108 = sadd.s32 %s107, 1
      %p111 = scmp.eq.s32.totalorder %s31, 1
      %p112 = scmp.ne.s32.totalorder %s107, %s109
      %p113 = scmp.eq.s32.totalorder %s31, 0
      %p114 = por %p112, %p113
      %p115 = scmp.ne.s32.totalorder %s107, %s109
      %p116 = scmp.eq.s32.totalorder %s36, 1
      %p117 = por %p115, %p116
      %p118 = scmp.ne.s32.totalorder %s109, %s110
      %p119 = scmp.eq.s32.totalorder %s36, 0
      %p120 = por %p118, %p119
      %p121 = scmp.ne.s32.totalorder %s109, %s110
      %p122 = scmp.eq.s32.totalorder %s37, 1
      %p123 = por %p121, %p122
      %p125 = scmp.ne.s32.totalorder %s110, %s124
      %p126 = scmp.eq.s32.totalorder %s37, 0
      %p127 = por %p125, %p126
      %s129 = sadd.s32 %s128, 1
      %p132 = scmp.eq.s32.totalorder %s31, 1
      %p133 = scmp.ne.s32.totalorder %s128, %s130
      %p134 = scmp.eq.s32.totalorder %s31, 0
      %p135 = por %p133, %p134
      %p136 = scmp.ne.s32.totalorder %s128, %s130
      %p137 = scmp.eq.s32.totalorder %s36, 1
      %p138 = por %p136, %p137
      %p139 = scmp.ne.s32.totalorder %s130, %s131
      %p140 = scmp.eq.s32.totalorder %s36, 0
      %p141 = por %p139, %p140
      %p142 = scmp.ne.s32.totalorder %s130, %s131
      %p143 = scmp.eq.s32.totalorder %s37, 1
      %p144 = por %p142, %p143
      %p146 = scmp.ne.s32.totalorder %s131, %s145
      %p147 = scmp.eq.s32.totalorder %s37, 0
      %p148 = por %p146, %p147
      %s150 = sadd.s32 %s149, 1
      %p153 = scmp.eq.s32.totalorder %s31, 1
      %p154 = scmp.ne.s32.totalorder %s149, %s151
      %p155 = scmp.eq.s32.totalorder %s31, 0
      %p156 = por %p154, %p155
      %p157 = scmp.ne.s32.totalorder %s149, %s151
      %p158 = scmp.eq.s32.totalorder %s36, 1
      %p159 = por %p157, %p158
      %p160 = scmp.ne.s32.totalorder %s151, %s152
      %p161 = scmp.eq.s32.totalorder %s36, 0
      %p162 = por %p160, %p161
      %p163 = scmp.ne.s32.totalorder %s151, %s152
      %p164 = scmp.eq.s32.totalorder %s37, 1
      %p165 = por %p163, %p164
      %p167 = scmp.ne.s32.totalorder %s152, %s166
      %p168 = scmp.eq.s32.totalorder %s37, 0
      %p169 = por %p167, %p168
      %s171 = sadd.s32 %s170, 1
      %p174 = scmp.eq.s32.totalorder %s31, 1
      %p175 = scmp.ne.s32.totalorder %s170, %s172
      %p176 = scmp.eq.s32.totalorder %s31, 0
      %p177 = por %p175, %p176
      %p178 = scmp.ne.s32.totalorder %s170, %s172
      %p179 = scmp.eq.s32.totalorder %s36, 1
      %p180 = por %p178, %p179
      %p181 = scmp.ne.s32.totalorder %s172, %s173
      %p182 = scmp.eq.s32.totalorder %s36, 0
      %p183 = por %p181, %p182
      %p184 = scmp.ne.s32.totalorder %s172, %s173
      %p185 = scmp.eq.s32.totalorder %s37, 1
      %p186 = por %p184, %p185
      %p188 = scmp.ne.s32.totalorder %s173, %s187
      %p189 = scmp.eq.s32.totalorder %s37, 0
      %p190 = por %p188, %p189
      %s192 = sadd.s32 %s191, 1
      %p195 = scmp.eq.s32.totalorder %s31, 1
      %p196 = scmp.ne.s32.totalorder %s191, %s193
      %p197 = scmp.eq.s32.totalorder %s31, 0
      %p198 = por %p196, %p197
      %p199 = scmp.ne.s32.totalorder %s191, %s193
      %p200 = scmp.eq.s32.totalorder %s36, 1
      %p201 = por %p199, %p200
      %p202 = scmp.ne.s32.totalorder %s193, %s194
      %p203 = scmp.eq.s32.totalorder %s36, 0
      %p204 = por %p202, %p203
      %p205 = scmp.ne.s32.totalorder %s193, %s194
      %p206 = scmp.eq.s32.totalorder %s37, 1
      %p207 = por %p205, %p206
      %p209 = scmp.ne.s32.totalorder %s194, %s208
      %p210 = scmp.eq.s32.totalorder %s37, 0
      %p211 = por %p209, %p210
      %s213 = sadd.s32 %s212, 1
      %p216 = scmp.eq.s32.totalorder %s31, 1
      %p217 = scmp.ne.s32.totalorder %s212, %s214
      %p218 = scmp.eq.s32.totalorder %s31, 0
      %p219 = por %p217, %p218
      %p220 = scmp.ne.s32.totalorder %s212, %s214
      %p221 = scmp.eq.s32.totalorder %s36, 1
      %p222 = por %p220, %p221
      %p223 = scmp.ne.s32.totalorder %s214, %s215
      %p224 = scmp.eq.s32.totalorder %s36, 0
      %p225 = por %p223, %p224
      %p226 = scmp.ne.s32.totalorder %s214, %s215
      %p227 = scmp.eq.s32.totalorder %s37, 1
      %p228 = por %p226, %p227
      %p230 = scmp.ne.s32.totalorder %s215, %s229
      %p231 = scmp.eq.s32.totalorder %s37, 0
      %p232 = por %p230, %p231
      %s234 = sadd.s32 %s233, 1
      %p237 = scmp.eq.s32.totalorder %s31, 1
      %p238 = scmp.ne.s32.totalorder %s233, %s235
      %p239 = scmp.eq.s32.totalorder %s31, 0
      %p240 = por %p238, %p239
      %p241 = scmp.ne.s32.totalorder %s233, %s235
      %p242 = scmp.eq.s32.totalorder %s36, 1
      %p243 = por %p241, %p242
      %p244 = scmp.ne.s32.totalorder %s235, %s236
      %p245 = scmp.eq.s32.totalorder %s36, 0
      %p246 = por %p244, %p245
      %p247 = scmp.ne.s32.totalorder %s235, %s236
      %p248 = scmp.eq.s32.totalorder %s37, 1
      %p249 = por %p247, %p248
      %p251 = scmp.ne.s32.totalorder %s236, %s250
      %p252 = scmp.eq.s32.totalorder %s37, 0
      %p253 = por %p251, %p252
      %s255 = sadd.s32 %s254, 1
      %p258 = scmp.eq.s32.totalorder %s31, 1
      %p259 = scmp.ne.s32.totalorder %s254, %s256
      %p260 = scmp.eq.s32.totalorder %s31, 0
      %p261 = por %p259, %p260
      %p262 = scmp.ne.s32.totalorder %s254, %s256
      %p263 = scmp.eq.s32.totalorder %s36, 1
      %p264 = por %p262, %p263
      %p265 = scmp.ne.s32.totalorder %s256, %s257
      %p266 = scmp.eq.s32.totalorder %s36, 0
      %p267 = por %p265, %p266
      %p268 = scmp.ne.s32.totalorder %s256, %s257
      %p269 = scmp.eq.s32.totalorder %s37, 1
      %p270 = por %p268, %p269
      %p272 = scmp.ne.s32.totalorder %s257, %s271
      %p273 = scmp.eq.s32.totalorder %s37, 0
      %p274 = por %p272, %p273
      %s276 = sadd.s32 %s275, 1
      %p279 = scmp.eq.s32.totalorder %s31, 1
      %p280 = scmp.ne.s32.totalorder %s275, %s277
      %p281 = scmp.eq.s32.totalorder %s31, 0
      %p282 = por %p280, %p281
      %p283 = scmp.ne.s32.totalorder %s275, %s277
      %p284 = scmp.eq.s32.totalorder %s36, 1
      %p285 = por %p283, %p284
      %p286 = scmp.ne.s32.totalorder %s277, %s278
      %p287 = scmp.eq.s32.totalorder %s36, 0
      %p288 = por %p286, %p287
      %p289 = scmp.ne.s32.totalorder %s277, %s278
      %p290 = scmp.eq.s32.totalorder %s37, 1
      %p291 = por %p289, %p290
      %p293 = scmp.ne.s32.totalorder %s278, %s292
      %p294 = scmp.eq.s32.totalorder %s37, 0
      %p295 = por %p293, %p294
      %s297 = sadd.s32 %s296, 1
      %p300 = scmp.eq.s32.totalorder %s31, 1
      %p301 = scmp.ne.s32.totalorder %s296, %s298
      %p302 = scmp.eq.s32.totalorder %s31, 0
      %p303 = por %p301, %p302
      %p304 = scmp.ne.s32.totalorder %s296, %s298
      %p305 = scmp.eq.s32.totalorder %s36, 1
      %p306 = por %p304, %p305
      %p307 = scmp.ne.s32.totalorder %s298, %s299
      %p308 = scmp.eq.s32.totalorder %s36, 0
      %p309 = por %p307, %p308
      %p310 = scmp.ne.s32.totalorder %s298, %s299
      %p311 = scmp.eq.s32.totalorder %s37, 1
      %p312 = por %p310, %p311
      %p314 = scmp.ne.s32.totalorder %s299, %s313
      %p315 = scmp.eq.s32.totalorder %s37, 0
      %p316 = por %p314, %p315
      %s317 = ssub.s32 %s31, %s38
      %p318 = scmp.eq.s32.totalorder %s317, 0
      %s320 = sadd.s32 %s319, 1
      %s321 = scalar_select %p318, %s319, %s320
      %p324 = pneg %p318
      %p325 = scmp.eq.s32.totalorder %s31, 1
      %p326 = por %p324, %p325
      %p327 = scmp.ne.s32.totalorder %s319, %s322
      %p328 = scmp.eq.s32.totalorder %s31, 0
      %p329 = por %p327, %p328
      %p330 = scmp.ne.s32.totalorder %s319, %s322
      %p331 = scmp.eq.s32.totalorder %s36, 1
      %p332 = por %p330, %p331
      %p333 = scmp.ne.s32.totalorder %s322, %s323
      %p334 = scmp.eq.s32.totalorder %s36, 0
      %p335 = por %p333, %p334
      %p336 = scmp.ne.s32.totalorder %s322, %s323
      %p337 = scmp.eq.s32.totalorder %s37, 1
      %p338 = por %p336, %p337
      %p340 = scmp.ne.s32.totalorder %s323, %s339
      %p341 = scmp.eq.s32.totalorder %s37, 0
      %p342 = por %p340, %p341
      %p343 = scmp.le.s32.totalorder 1, %s31
      %p344 = scmp.lt.s32.totalorder %s31, 3
      %p345 = pnand %p343, %p344
      %p346 = pneg %p345
      // Predicated region
      $region9: #{tpu_custom_call.1} parent=5 // pred_check
        _
      $region10: #{tpu_custom_call.1} parent=5 // pred_check_branch
        %348 = sbr.rel (%p345) target = $region12
      $region11: #{tpu_custom_call.1} parent=5 // pred_region
        %s349 = ssub.s32 %s31, 1
        // Predicated region
        $region13: #{tpu_custom_call.1} parent=11 // pred_check
          %p350 = pneg %p78
        $region14: #{tpu_custom_call.1} parent=11 // pred_check_branch
          %352 = sbr.rel (%p350) target = $region16
        $region15: #{tpu_custom_call.1} parent=11 // pred_region
          _
        $region16: #{tpu_custom_call.1} parent=11 // pred_fallthru
          _
        // Predicated region
        $region17: #{tpu_custom_call.1} parent=11 // pred_check
          %p353 = pneg %p99
        $region18: #{tpu_custom_call.1} parent=11 // pred_check_branch
          %355 = sbr.rel (%p353) target = $region20
        $region19: #{tpu_custom_call.1} parent=11 // pred_region
          _
        $region20: #{tpu_custom_call.1} parent=11 // pred_fallthru
          _
        // Predicated region
        $region21: #{tpu_custom_call.1} parent=11 // pred_check
          %p356 = pneg %p120
        $region22: #{tpu_custom_call.1} parent=11 // pred_check_branch
          %358 = sbr.rel (%p356) target = $region24
        $region23: #{tpu_custom_call.1} parent=11 // pred_region
          %s360 = ssub.s32 6144, 6144
          %361 = vsyncadd [#allocation6], %s360
          %s362 = sshll.u32 [#allocation5], 4
          %s363 = int_to_ptr.vmem [resolvable:$true] %s362
          %368 = dma.hbm_to_vmem [thread:$0]  %s4, 6144, %s363, [#allocation6], 64, 64, 4
        $region24: #{tpu_custom_call.1} parent=11 // pred_fallthru
          _
        // Predicated region
        $region25: #{tpu_custom_call.1} parent=11 // pred_check
          %p369 = pneg %p141
        $region26: #{tpu_custom_call.1} parent=11 // pred_check_branch
          %371 = sbr.rel (%p369) target = $region28
        $region27: #{tpu_custom_call.1} parent=11 // pred_region
          _
        $region28: #{tpu_custom_call.1} parent=11 // pred_fallthru
          _
        // Predicated region
        $region29: #{tpu_custom_call.1} parent=11 // pred_check
          %p372 = pneg %p162
        $region30: #{tpu_custom_call.1} parent=11 // pred_check_branch
          %374 = sbr.rel (%p372) target = $region32
        $region31: #{tpu_custom_call.1} parent=11 // pred_region
          _
        $region32: #{tpu_custom_call.1} parent=11 // pred_fallthru
          _
        // Predicated region
        $region33: #{tpu_custom_call.1} parent=11 // pred_check
          %p375 = pneg %p183
        $region34: #{tpu_custom_call.1} parent=11 // pred_check_branch
          %377 = sbr.rel (%p375) target = $region36
        $region35: #{tpu_custom_call.1} parent=11 // pred_region
          _
        $region36: #{tpu_custom_call.1} parent=11 // pred_fallthru
          _
        // Predicated region
        $region37: #{tpu_custom_call.1} parent=11 // pred_check
          %p378 = pneg %p204
        $region38: #{tpu_custom_call.1} parent=11 // pred_check_branch
          %380 = sbr.rel (%p378) target = $region40
        $region39: #{tpu_custom_call.1} parent=11 // pred_region
          %s382 = ssub.s32 6144, 6144
          %383 = vsyncadd [#allocation9], %s382
          %s384 = sshll.u32 [#allocation8], 4
          %s385 = int_to_ptr.vmem [resolvable:$true] %s384
          %390 = dma.hbm_to_vmem [thread:$0]  %s8, 6144, %s385, [#allocation9], 64, 64, 4
        $region40: #{tpu_custom_call.1} parent=11 // pred_fallthru
          _
        // Predicated region
        $region41: #{tpu_custom_call.1} parent=11 // pred_check
          %p391 = pneg %p225
        $region42: #{tpu_custom_call.1} parent=11 // pred_check_branch
          %393 = sbr.rel (%p391) target = $region44
        $region43: #{tpu_custom_call.1} parent=11 // pred_region
          _
        $region44: #{tpu_custom_call.1} parent=11 // pred_fallthru
          _
        // Predicated region
        $region45: #{tpu_custom_call.1} parent=11 // pred_check
          %p394 = pneg %p246
        $region46: #{tpu_custom_call.1} parent=11 // pred_check_branch
          %396 = sbr.rel (%p394) target = $region48
        $region47: #{tpu_custom_call.1} parent=11 // pred_region
          _
        $region48: #{tpu_custom_call.1} parent=11 // pred_fallthru
          _
        // Predicated region
        $region49: #{tpu_custom_call.1} parent=11 // pred_check
          %p397 = pneg %p267
        $region50: #{tpu_custom_call.1} parent=11 // pred_check_branch
          %399 = sbr.rel (%p397) target = $region52
        $region51: #{tpu_custom_call.1} parent=11 // pred_region
          _
        $region52: #{tpu_custom_call.1} parent=11 // pred_fallthru
          _
        // Predicated region
        $region53: #{tpu_custom_call.1} parent=11 // pred_check
          %p400 = pneg %p288
        $region54: #{tpu_custom_call.1} parent=11 // pred_check_branch
          %402 = sbr.rel (%p400) target = $region56
        $region55: #{tpu_custom_call.1} parent=11 // pred_region
          %s404 = ssub.s32 1024, 1024
          %405 = vsyncadd [#allocation9], %s404
          %s406 = sshll.u32 [#allocation10], 4
          %s407 = int_to_ptr.vmem [resolvable:$true] %s406
          %412 = dma.hbm_to_vmem [thread:$0]  %s12, 1024, %s407, [#allocation9], 64, 64, 4
        $region56: #{tpu_custom_call.1} parent=11 // pred_fallthru
          _
        // Predicated region
        $region57: #{tpu_custom_call.1} parent=11 // pred_check
          %p413 = pneg %p309
        $region58: #{tpu_custom_call.1} parent=11 // pred_check_branch
          %415 = sbr.rel (%p413) target = $region60
        $region59: #{tpu_custom_call.1} parent=11 // pred_region
          _
        $region60: #{tpu_custom_call.1} parent=11 // pred_fallthru
          _
      $region12: #{tpu_custom_call.1} parent=5 // pred_fallthru
        _
      %p416 = scmp.lt.s32.totalorder %s31, 2
      // Predicated region
      $region61: #{tpu_custom_call.1} parent=5 // pred_check
        %p417 = pneg %p416
      $region62: #{tpu_custom_call.1} parent=5 // pred_check_branch
        %419 = sbr.rel (%p417) target = $region64
      $region63: #{tpu_custom_call.1} parent=5 // pred_region
        // Predicated region
        $region65: #{tpu_custom_call.1} parent=63 // pred_check
          %p420 = pneg %p51
        $region66: #{tpu_custom_call.1} parent=63 // pred_check_branch
          %422 = sbr.rel (%p420) target = $region68
        $region67: #{tpu_custom_call.1} parent=63 // pred_region
          %p423 = scmp.lt.s32.totalorder %s31, 1
          %s424 = scalar_select %p423, %s31, 1
          %s425 = smul.addr %s424, 4
          %s426 = smul.addr %s425, 4
          %s427 = scalar_lea.vmem %s1, %s426
        $region68: #{tpu_custom_call.1} parent=63 // pred_fallthru
          _
      $region64: #{tpu_custom_call.1} parent=5 // pred_fallthru
        _
      %p428 = scmp.le.s32.totalorder 1, %s31
      %p429 = scmp.lt.s32.totalorder %s31, 3
      %p430 = pnand %p428, %p429
      %p431 = pneg %p430
      // Predicated region
      $region69: #{tpu_custom_call.1} parent=5 // pred_check
        _
      $region70: #{tpu_custom_call.1} parent=5 // pred_check_branch
        %433 = sbr.rel (%p430) target = $region72
      $region71: #{tpu_custom_call.1} parent=5 // pred_region
        %s434 = ssub.s32 %s31, 1
        // Predicated region
        $region73: #{tpu_custom_call.1} parent=71 // pred_check
          %p435 = pneg %p120
        $region74: #{tpu_custom_call.1} parent=71 // pred_check_branch
          %437 = sbr.rel (%p435) target = $region76
        $region75: #{tpu_custom_call.1} parent=71 // pred_region
          %438 = dma.done [#allocation6], 6144
        $region76: #{tpu_custom_call.1} parent=71 // pred_fallthru
          _
        // Predicated region
        $region77: #{tpu_custom_call.1} parent=71 // pred_check
          %p439 = pneg %p204
        $region78: #{tpu_custom_call.1} parent=71 // pred_check_branch
          %441 = sbr.rel (%p439) target = $region80
        $region79: #{tpu_custom_call.1} parent=71 // pred_region
          %442 = dma.done [#allocation9], 6144
        $region80: #{tpu_custom_call.1} parent=71 // pred_fallthru
          _
        // Predicated region
        $region81: #{tpu_custom_call.1} parent=71 // pred_check
          %p443 = pneg %p288
        $region82: #{tpu_custom_call.1} parent=71 // pred_check_branch
          %445 = sbr.rel (%p443) target = $region84
        $region83: #{tpu_custom_call.1} parent=71 // pred_region
          %446 = dma.done [#allocation9], 1024
        $region84: #{tpu_custom_call.1} parent=71 // pred_fallthru
          _
        %p447 = scmp.lt.s32.totalorder %s36, 1
        %s448 = scalar_select %p447, %s36, 1
        %s449 = smul.addr %s448, 4
        %s450 = smul.addr %s449, 4
        %s451 = scalar_lea.vmem %s1, %s450
        %p452 = pneg %p57
        %p453 = pneg %p54
        %p454 = pneg %p78
        %p455 = pneg %p75
        %p456 = pneg %p99
        %p457 = pneg %p96
        %p458 = pneg %p120
        %p459 = pneg %p117
        %p460 = pneg %p141
        %p461 = pneg %p138
        %p462 = pneg %p162
        %p463 = pneg %p159
        %p464 = pneg %p183
        %p465 = pneg %p180
        %p466 = pneg %p204
        %p467 = pneg %p201
        %p468 = pneg %p225
        %p469 = pneg %p222
        %p470 = pneg %p246
        %p471 = pneg %p243
        %p472 = pneg %p267
        %p473 = pneg %p264
        %p474 = pneg %p288
        %p475 = pneg %p285
        %p476 = pneg %p309
        %p477 = pneg %p306
        %p478 = pneg %p335
        %p479 = pneg %p332
        %s480 = sand.u32 %s322, 1
        %s481 = scalar_lea.sflag [#allocation7], %s480
        %s482 = sand.u32 %s322, 1
        %s483 = smul.addr %s482, 32
        %s484 = scalar_lea.vmem [#allocation11], %s483
        %p485 = scmp.lt.s32.totalorder %s36, 1
        %s486 = scalar_select %p485, %s36, 1
        %s487 = smul.addr %s486, 4
        %s488 = smul.addr %s487, 4
        %s489 = scalar_lea.vmem %s1, %s488
        %491 = vst [vmem:[#allocation2] sm:$0xff] 0.0
        %492 = vst [vmem:[#allocation2 + $0x8] sm:$0xff] 0.0
        %v493 = vld [vmem:[%s489] sm:$0xf]
        %v494 = vld [vmem:[%s489 + $0x4] sm:$0xf]
        %v495 = vld [vmem:[%s489 + $0x8] sm:$0xf]
        %v496 = vld [vmem:[%s489 + $0xc] sm:$0xf]
        %v497 = vld [vmem:[%s2] sm:$0xf]
        %v498 = vld [vmem:[%s3] sm:$0x1]
        %v500 = vlaneseq
        %v501 = vshrl.u32 %v500, 7
        %v502 = vsub.s32 0, %v501
        %v503 = vrot.slane %v498, %v502
        %v509 = vunpack.c.l.b16 %v493
        %v510 = vunpack.c.l.b16 %v494
        %v511 = vunpack.c.l.b16 %v495
        %v512 = vunpack.c.l.b16 %v496
        %v513 = vpack.c.b16 %v510, %v509
        %v514 = vpack.c.b16 %v512, %v511
        %vm515 = vcmask 64512
        %v517 = vsel %vm515, %v513, 0
        %v520 = vsel %vm515, %v514, 0
        %vm522 = vcmask 1043456
        %v524 = vsel %vm522, %v497, 0
        %526 = vmatprep.subr.bf16.mxu0 0
        %527 = vmatpush1.bf16.msra.mxu0 0
        %528 = vmatprep.subr.bf16.mxu0 0
        %529 = vmatpush1.bf16.msra.mxu0 0
        %530 = vmatprep.subr.bf16.mxu0 0
        %531 = vmatpush1.bf16.msra.mxu0 0
        %532 = vmatprep.subr.bf16.mxu0 0
        %533 = vmatpush1.bf16.msra.mxu0 0
        %534 = vmatprep.subr.bf16.mxu0 0
        %535 = vmatpush1.bf16.msra.mxu0 0
        %536 = vmatprep.subr.bf16.mxu0 0
        %537 = vmatpush1.bf16.msra.mxu0 0
        %538 = vmatprep.subr.bf16.mxu0 0
        %539 = vmatpush1.bf16.msra.mxu0 0
        %540 = vmatprep.subr.bf16.mxu0 0
        %541 = vmatpush1.bf16.msra.mxu0 %v524
        %542 = vmatprep.subr.bf16.mxu0 0
        %543 = vmatpush2.bf16.msra.mxu0 0
        %544 = vmatprep.subr.bf16.mxu0 0
        %545 = vmatpush2.bf16.msra.mxu0 0
        %546 = vmatprep.subr.bf16.mxu0 0
        %547 = vmatpush2.bf16.msra.mxu0 0
        %548 = vmatprep.subr.bf16.mxu0 0
        %549 = vmatpush2.bf16.msra.mxu0 0
        %550 = vmatprep.subr.bf16.mxu0 0
        %551 = vmatpush2.bf16.msra.mxu0 0
        %552 = vmatprep.subr.bf16.mxu0 0
        %553 = vmatpush2.bf16.msra.mxu0 0
        %554 = vmatprep.subr.bf16.mxu0 0
        %555 = vmatpush2.bf16.msra.mxu0 0
        %556 = vmatprep.subr.bf16.mxu0 0
        %557 = vmatpush2.bf16.msra.mxu0 0
        %558 = vmatprep.mubr.bf16.mxu0 0
        %559 = vmatmul.mubr.bf16.gmra.mxu0 %v517
        %v560 = vpop.f32.mrf.mxu0
        %v561 = vadd.f32 %v503, %v560
        %v562 = vpop.f32.mrf.mxu0
        %v563 = vpop.f32.mrf.mxu0
        %v564 = vadd.f32 %v503, %v563
        %v565 = vpop.f32.mrf.mxu0
        %566 = vmatprep.mubr.bf16.mxu0 0
        %567 = vmatmul.mubr.bf16.gmra.mxu0 %v520
        %v568 = vpop.f32.mrf.mxu0
        %v569 = vadd.f32 %v503, %v568
        %v570 = vpop.f32.mrf.mxu0
        %v571 = vpop.f32.mrf.mxu0
        %v572 = vadd.f32 %v503, %v571
        %v573 = vpop.f32.mrf.mxu0
        %574 = vdwg.mxu0
        %575 = vst [vmem:[#allocation2 + $0x10] sm:$0xff] %v561
        %576 = vst [vmem:[#allocation2 + $0x18] sm:$0xff] %v564
        %577 = vst [vmem:[#allocation2 + $0x20] sm:$0xff] %v569
        %578 = vst [vmem:[#allocation2 + $0x28] sm:$0xff] %v572
        %v579 = vld [vmem:[#allocation2 + $0xe] sm:$0xff]
        %v580 = vld [vmem:[#allocation2 + $0x16] sm:$0xff]
        %v581 = vld [vmem:[#allocation2 + $0x1e] sm:$0xff]
        %v582 = vld [vmem:[#allocation2 + $0x26] sm:$0xff]
        %v583 = vld [vmem:[#allocation2 + $0xf] sm:$0xff]
        %v584 = vld [vmem:[#allocation2 + $0x17] sm:$0xff]
        %v585 = vld [vmem:[#allocation2 + $0x1f] sm:$0xff]
        %v586 = vld [vmem:[#allocation2 + $0x27] sm:$0xff]
        %v587 = vld [vmem:[#allocation2 + $0x10] sm:$0xff]
        %v588 = vld [vmem:[#allocation2 + $0x18] sm:$0xff]
        %v589 = vld [vmem:[#allocation2 + $0x20] sm:$0xff]
        %v590 = vld [vmem:[#allocation2 + $0x28] sm:$0xff]
        %v591 = vpack.c.bf16 %v580, %v579
        %v592 = vpack.c.bf16 %v584, %v583
        %v593 = vpack.c.bf16 %v588, %v587
        %v594 = vpack.c.bf16 %v582, %v581
        %v595 = vpack.c.bf16 %v586, %v585
        %v596 = vpack.c.bf16 %v590, %v589
        %v597 = vld [vmem:[#allocation5] sm:$0xf]
        %v598 = vld [vmem:[#allocation5 + $0x4] sm:$0xf]
        %v599 = vld [vmem:[#allocation5 + $0x8] sm:$0xf]
        %v600 = vld [vmem:[#allocation5 + $0xc] sm:$0xf]
        %v601 = vld [vmem:[#allocation5 + $0x10] sm:$0xf]
        %v602 = vld [vmem:[#allocation5 + $0x14] sm:$0xf]
        %v603 = vld [vmem:[#allocation5 + $0x18] sm:$0xf]
        %v604 = vld [vmem:[#allocation5 + $0x1c] sm:$0xf]
        %v605 = vld [vmem:[#allocation5 + $0x20] sm:$0xf]
        %v606 = vld [vmem:[#allocation5 + $0x24] sm:$0xf]
        %v607 = vld [vmem:[#allocation5 + $0x28] sm:$0xf]
        %v608 = vld [vmem:[#allocation5 + $0x2c] sm:$0xf]
        %v609 = vld [vmem:[#allocation5 + $0x30] sm:$0xf]
        %v610 = vld [vmem:[#allocation5 + $0x34] sm:$0xf]
        %v611 = vld [vmem:[#allocation5 + $0x38] sm:$0xf]
        %v612 = vld [vmem:[#allocation5 + $0x3c] sm:$0xf]
        %v613 = vld [vmem:[#allocation5 + $0x40] sm:$0xf]
        %v614 = vld [vmem:[#allocation5 + $0x44] sm:$0xf]
        %v615 = vld [vmem:[#allocation5 + $0x48] sm:$0xf]
        %v616 = vld [vmem:[#allocation5 + $0x4c] sm:$0xf]
        %v617 = vld [vmem:[#allocation5 + $0x50] sm:$0xf]
        %v618 = vld [vmem:[#allocation5 + $0x54] sm:$0xf]
        %v619 = vld [vmem:[#allocation5 + $0x58] sm:$0xf]
        %v620 = vld [vmem:[#allocation5 + $0x5c] sm:$0xf]
        %v621 = vld [vmem:[#allocation5 + $0x60] sm:$0xf]
        %v622 = vld [vmem:[#allocation5 + $0x64] sm:$0xf]
        %v623 = vld [vmem:[#allocation5 + $0x68] sm:$0xf]
        %v624 = vld [vmem:[#allocation5 + $0x6c] sm:$0xf]
        %v625 = vld [vmem:[#allocation5 + $0x70] sm:$0xf]
        %v626 = vld [vmem:[#allocation5 + $0x74] sm:$0xf]
        %v627 = vld [vmem:[#allocation5 + $0x78] sm:$0xf]
        %v628 = vld [vmem:[#allocation5 + $0x7c] sm:$0xf]
        %v629 = vld [vmem:[#allocation5 + $0x80] sm:$0xf]
        %v630 = vld [vmem:[#allocation5 + $0x84] sm:$0xf]
        %v631 = vld [vmem:[#allocation5 + $0x88] sm:$0xf]
        %v632 = vld [vmem:[#allocation5 + $0x8c] sm:$0xf]
        %v633 = vld [vmem:[#allocation5 + $0x90] sm:$0xf]
        %v634 = vld [vmem:[#allocation5 + $0x94] sm:$0xf]
        %v635 = vld [vmem:[#allocation5 + $0x98] sm:$0xf]
        %v636 = vld [vmem:[#allocation5 + $0x9c] sm:$0xf]
        %v637 = vld [vmem:[#allocation5 + $0xa0] sm:$0xf]
        %v638 = vld [vmem:[#allocation5 + $0xa4] sm:$0xf]
        %v639 = vld [vmem:[#allocation5 + $0xa8] sm:$0xf]
        %v640 = vld [vmem:[#allocation5 + $0xac] sm:$0xf]
        %v641 = vld [vmem:[#allocation5 + $0xb0] sm:$0xf]
        %v642 = vld [vmem:[#allocation5 + $0xb4] sm:$0xf]
        %v643 = vld [vmem:[#allocation5 + $0xb8] sm:$0xf]
        %v644 = vld [vmem:[#allocation5 + $0xbc] sm:$0xf]
        %v645 = vld [vmem:[%s5] sm:$0x1]
        %v646 = vlaneseq
        %v647 = vshrl.u32 %v646, 7
        %v648 = vsub.s32 0, %v647
        %v649 = vrot.slane %v645, %v648
        %v698 = vunpack.c.l.b16 %v597
        %v699 = vunpack.c.l.b16 %v598
        %v700 = vunpack.c.l.b16 %v599
        %v701 = vunpack.c.l.b16 %v600
        %v702 = vunpack.c.l.b16 %v601
        %v703 = vunpack.c.l.b16 %v602
        %v704 = vunpack.c.l.b16 %v603
        %v705 = vunpack.c.l.b16 %v604
        %v706 = vunpack.c.l.b16 %v605
        %v707 = vunpack.c.l.b16 %v606
        %v708 = vunpack.c.l.b16 %v607
        %v709 = vunpack.c.l.b16 %v608
        %v710 = vunpack.c.l.b16 %v609
        %v711 = vunpack.c.l.b16 %v610
        %v712 = vunpack.c.l.b16 %v611
        %v713 = vunpack.c.l.b16 %v612
        %v714 = vunpack.c.l.b16 %v613
        %v715 = vunpack.c.l.b16 %v614
        %v716 = vunpack.c.l.b16 %v615
        %v717 = vunpack.c.l.b16 %v616
        %v718 = vunpack.c.l.b16 %v617
        %v719 = vunpack.c.l.b16 %v618
        %v720 = vunpack.c.l.b16 %v619
        %v721 = vunpack.c.l.b16 %v620
        %v722 = vunpack.c.l.b16 %v621
        %v723 = vunpack.c.l.b16 %v622
        %v724 = vunpack.c.l.b16 %v623
        %v725 = vunpack.c.l.b16 %v624
        %v726 = vunpack.c.l.b16 %v625
        %v727 = vunpack.c.l.b16 %v626
        %v728 = vunpack.c.l.b16 %v627
        %v729 = vunpack.c.l.b16 %v628
        %v730 = vunpack.c.l.b16 %v629
        %v731 = vunpack.c.l.b16 %v630
        %v732 = vunpack.c.l.b16 %v631
        %v733 = vunpack.c.l.b16 %v632
        %v734 = vunpack.c.l.b16 %v633
        %v735 = vunpack.c.l.b16 %v634
        %v736 = vunpack.c.l.b16 %v635
        %v737 = vunpack.c.l.b16 %v636
        %v738 = vunpack.c.l.b16 %v637
        %v739 = vunpack.c.l.b16 %v638
        %v740 = vunpack.c.l.b16 %v639
        %v741 = vunpack.c.l.b16 %v640
        %v742 = vunpack.c.l.b16 %v641
        %v743 = vunpack.c.l.b16 %v642
        %v744 = vunpack.c.l.b16 %v643
        %v745 = vunpack.c.l.b16 %v644
        %v746 = vpack.c.b16 %v699, %v698
        %v747 = vpack.c.b16 %v701, %v700
        %v748 = vpack.c.b16 %v703, %v702
        %v749 = vpack.c.b16 %v705, %v704
        %v750 = vpack.c.b16 %v707, %v706
        %v751 = vpack.c.b16 %v709, %v708
        %v752 = vpack.c.b16 %v711, %v710
        %v753 = vpack.c.b16 %v713, %v712
        %v754 = vpack.c.b16 %v715, %v714
        %v755 = vpack.c.b16 %v717, %v716
        %v756 = vpack.c.b16 %v719, %v718
        %v757 = vpack.c.b16 %v721, %v720
        %v758 = vpack.c.b16 %v723, %v722
        %v759 = vpack.c.b16 %v725, %v724
        %v760 = vpack.c.b16 %v727, %v726
        %v761 = vpack.c.b16 %v729, %v728
        %v762 = vpack.c.b16 %v731, %v730
        %v763 = vpack.c.b16 %v733, %v732
        %v764 = vpack.c.b16 %v735, %v734
        %v765 = vpack.c.b16 %v737, %v736
        %v766 = vpack.c.b16 %v739, %v738
        %v767 = vpack.c.b16 %v741, %v740
        %v768 = vpack.c.b16 %v743, %v742
        %v769 = vpack.c.b16 %v745, %v744
        %794 = vmatprep.subr.bf16.mxu0 0
        %795 = vmatpush1.bf16.msra.mxu0 %v753
        %796 = vmatprep.subr.bf16.mxu0 0
        %797 = vmatpush1.bf16.msra.mxu0 %v752
        %798 = vmatprep.subr.bf16.mxu0 0
        %799 = vmatpush1.bf16.msra.mxu0 %v751
        %800 = vmatprep.subr.bf16.mxu0 0
        %801 = vmatpush1.bf16.msra.mxu0 %v750
        %802 = vmatprep.subr.bf16.mxu0 0
        %803 = vmatpush1.bf16.msra.mxu0 %v749
        %804 = vmatprep.subr.bf16.mxu0 0
        %805 = vmatpush1.bf16.msra.mxu0 %v748
        %806 = vmatprep.subr.bf16.mxu0 0
        %807 = vmatpush1.bf16.msra.mxu0 %v747
        %808 = vmatprep.subr.bf16.mxu0 0
        %809 = vmatpush1.bf16.msra.mxu0 %v746
        %810 = vmatprep.subr.bf16.mxu0 0
        %811 = vmatpush2.bf16.msra.mxu0 %v761
        %812 = vmatprep.subr.bf16.mxu0 0
        %813 = vmatpush2.bf16.msra.mxu0 %v760
        %814 = vmatprep.subr.bf16.mxu0 0
        %815 = vmatpush2.bf16.msra.mxu0 %v759
        %816 = vmatprep.subr.bf16.mxu0 0
        %817 = vmatpush2.bf16.msra.mxu0 %v758
        %818 = vmatprep.subr.bf16.mxu0 0
        %819 = vmatpush2.bf16.msra.mxu0 %v757
        %820 = vmatprep.subr.bf16.mxu0 0
        %821 = vmatpush2.bf16.msra.mxu0 %v756
        %822 = vmatprep.subr.bf16.mxu0 0
        %823 = vmatpush2.bf16.msra.mxu0 %v755
        %824 = vmatprep.subr.bf16.mxu0 0
        %825 = vmatpush2.bf16.msra.mxu0 %v754
        %826 = vmatprep.mubr.bf16.mxu0 %v592
        %827 = vmatmul.mubr.bf16.gmra.mxu0 %v591
        %v828 = vpop.f32.mrf.mxu0
        %v829 = vadd.f32 %v649, %v828
        %v830 = vpop.f32.mrf.mxu0
        %v831 = vpop.f32.mrf.mxu0
        %v832 = vadd.f32 %v649, %v831
        %v833 = vpop.f32.mrf.mxu0
        %834 = vmatprep.mubr.bf16.mxu0 %v595
        %835 = vmatmul.mubr.bf16.gmra.mxu0 %v594
        %v836 = vpop.f32.mrf.mxu0
        %v837 = vadd.f32 %v649, %v836
        %v838 = vpop.f32.mrf.mxu0
        %v839 = vpop.f32.mrf.mxu0
        %v840 = vadd.f32 %v649, %v839
        %v841 = vpop.f32.mrf.mxu0
        %842 = vdwg.mxu0
        %843 = vmatprep.subr.bf16.mxu0 0
        %844 = vmatpush1.bf16.msra.mxu0 %v769
        %845 = vmatprep.subr.bf16.mxu0 0
        %846 = vmatpush1.bf16.msra.mxu0 %v768
        %847 = vmatprep.subr.bf16.mxu0 0
        %848 = vmatpush1.bf16.msra.mxu0 %v767
        %849 = vmatprep.subr.bf16.mxu0 0
        %850 = vmatpush1.bf16.msra.mxu0 %v766
        %851 = vmatprep.subr.bf16.mxu0 0
        %852 = vmatpush1.bf16.msra.mxu0 %v765
        %853 = vmatprep.subr.bf16.mxu0 0
        %854 = vmatpush1.bf16.msra.mxu0 %v764
        %855 = vmatprep.subr.bf16.mxu0 0
        %856 = vmatpush1.bf16.msra.mxu0 %v763
        %857 = vmatprep.subr.bf16.mxu0 0
        %858 = vmatpush1.bf16.msra.mxu0 %v762
        %859 = vmatprep.subr.bf16.mxu0 0
        %860 = vmatpush2.bf16.msra.mxu0 0
        %861 = vmatprep.subr.bf16.mxu0 0
        %862 = vmatpush2.bf16.msra.mxu0 0
        %863 = vmatprep.subr.bf16.mxu0 0
        %864 = vmatpush2.bf16.msra.mxu0 0
        %865 = vmatprep.subr.bf16.mxu0 0
        %866 = vmatpush2.bf16.msra.mxu0 0
        %867 = vmatprep.subr.bf16.mxu0 0
        %868 = vmatpush2.bf16.msra.mxu0 0
        %869 = vmatprep.subr.bf16.mxu0 0
        %870 = vmatpush2.bf16.msra.mxu0 0
        %871 = vmatprep.subr.bf16.mxu0 0
        %872 = vmatpush2.bf16.msra.mxu0 0
        %873 = vmatprep.subr.bf16.mxu0 0
        %874 = vmatpush2.bf16.msra.mxu0 0
        %875 = vmatprep.mubr.bf16.mxu0 0
        %876 = vmatmul.mubr.bf16.gmra.mxu0 %v593
        %v877 = vpop.f32.mrf.mxu0
        %v878 = vadd.f32 %v829, %v877
        %v879 = vpop.f32.mrf.mxu0
        %v880 = vpop.f32.mrf.mxu0
        %v881 = vadd.f32 %v832, %v880
        %v882 = vpop.f32.mrf.mxu0
        %883 = vmatprep.mubr.bf16.mxu0 0
        %884 = vmatmul.mubr.bf16.gmra.mxu0 %v596
        %v885 = vpop.f32.mrf.mxu0
        %v886 = vadd.f32 %v837, %v885
        %v887 = vpop.f32.mrf.mxu0
        %v888 = vpop.f32.mrf.mxu0
        %v889 = vadd.f32 %v840, %v888
        %v890 = vpop.f32.mrf.mxu0
        %891 = vdwg.mxu0
        %892 = vadd.xlane.f32.xlu0 %v878
        %v893 = vpop.xlane.xlu0 %892
        %894 = vadd.xlane.f32.xlu0 %v881
        %v895 = vpop.xlane.xlu0 %894
        %896 = vadd.xlane.f32.xlu0 %v886
        %v897 = vpop.xlane.xlu0 %896
        %898 = vadd.xlane.f32.xlu0 %v889
        %v899 = vpop.xlane.xlu0 %898
        %v900 = vrcp.pop 128.0
        %v901 = vmul.f32 %v893, %v900
        %v902 = vmul.f32 %v895, %v900
        %v903 = vmul.f32 %v897, %v900
        %v904 = vmul.f32 %v899, %v900
        %v905 = vsub.f32 %v878, %v901
        %v906 = vsub.f32 %v881, %v902
        %v907 = vsub.f32 %v886, %v903
        %v908 = vsub.f32 %v889, %v904
        %v909 = vmul.f32 %v905, %v905
        %v910 = vmul.f32 %v906, %v906
        %v911 = vmul.f32 %v907, %v907
        %v912 = vmul.f32 %v908, %v908
        %913 = vadd.xlane.f32.xlu0 %v909
        %v914 = vpop.xlane.xlu0 %913
        %915 = vadd.xlane.f32.xlu0 %v910
        %v916 = vpop.xlane.xlu0 %915
        %917 = vadd.xlane.f32.xlu0 %v911
        %v918 = vpop.xlane.xlu0 %917
        %919 = vadd.xlane.f32.xlu0 %v912
        %v920 = vpop.xlane.xlu0 %919
        %v921 = vmul.f32 %v914, %v900
        %v922 = vmul.f32 %v916, %v900
        %v923 = vmul.f32 %v918, %v900
        %v924 = vmul.f32 %v920, %v900
        %v925 = vadd.f32 %v921, 1e-08
        %v926 = vadd.f32 %v922, 1e-08
        %v927 = vadd.f32 %v923, 1e-08
        %v928 = vadd.f32 %v924, 1e-08
        %v929 = vrsqrt.pop %v925
        %v930 = vrsqrt.pop %v926
        %v931 = vrsqrt.pop %v927
        %v932 = vrsqrt.pop %v928
        %v933 = vmul.f32 %v905, %v929
        %v934 = vmul.f32 %v906, %v930
        %v935 = vmul.f32 %v907, %v931
        %v936 = vmul.f32 %v908, %v932
        %v937 = vld [vmem:[%s6] sm:$0x1]
        %v938 = vlaneseq
        %v939 = vshrl.u32 %v938, 7
        %v940 = vsub.s32 0, %v939
        %v941 = vrot.slane %v937, %v940
        %v942 = vmul.f32 %v933, %v941
        %v943 = vmul.f32 %v934, %v941
        %v944 = vmul.f32 %v935, %v941
        %v945 = vmul.f32 %v936, %v941
        %v946 = vld [vmem:[%s7] sm:$0x1]
        %v947 = vlaneseq
        %v948 = vshrl.u32 %v947, 7
        %v949 = vsub.s32 0, %v948
        %v950 = vrot.slane %v946, %v949
        %v951 = vadd.f32 %v942, %v950
        %v952 = vadd.f32 %v943, %v950
        %v953 = vadd.f32 %v944, %v950
        %v954 = vadd.f32 %v945, %v950
        %v955 = vmax.f32 %v951, 0.0
        %v956 = vmax.f32 %v952, 0.0
        %v957 = vmax.f32 %v953, 0.0
        %v958 = vmax.f32 %v954, 0.0
        %959 = vst [vmem:[#allocation2 + $0x10] sm:$0xff] %v955
        %960 = vst [vmem:[#allocation2 + $0x18] sm:$0xff] %v956
        %961 = vst [vmem:[#allocation2 + $0x20] sm:$0xff] %v957
        %962 = vst [vmem:[#allocation2 + $0x28] sm:$0xff] %v958
        %v963 = vld [vmem:[#allocation2 + $0xc] sm:$0xff]
        %v964 = vld [vmem:[#allocation2 + $0x14] sm:$0xff]
        %v965 = vld [vmem:[#allocation2 + $0x1c] sm:$0xff]
        %v966 = vld [vmem:[#allocation2 + $0x24] sm:$0xff]
        %v967 = vld [vmem:[#allocation2 + $0xe] sm:$0xff]
        %v968 = vld [vmem:[#allocation2 + $0x16] sm:$0xff]
        %v969 = vld [vmem:[#allocation2 + $0x1e] sm:$0xff]
        %v970 = vld [vmem:[#allocation2 + $0x26] sm:$0xff]
        %v971 = vld [vmem:[#allocation2 + $0x10] sm:$0xff]
        %v972 = vld [vmem:[#allocation2 + $0x18] sm:$0xff]
        %v973 = vld [vmem:[#allocation2 + $0x20] sm:$0xff]
        %v974 = vld [vmem:[#allocation2 + $0x28] sm:$0xff]
        %v975 = vpack.c.bf16 %v964, %v963
        %v976 = vpack.c.bf16 %v968, %v967
        %v977 = vpack.c.bf16 %v972, %v971
        %v978 = vpack.c.bf16 %v966, %v965
        %v979 = vpack.c.bf16 %v970, %v969
        %v980 = vpack.c.bf16 %v974, %v973
        %v981 = vld [vmem:[#allocation8] sm:$0xf]
        %v982 = vld [vmem:[#allocation8 + $0x4] sm:$0xf]
        %v983 = vld [vmem:[#allocation8 + $0x8] sm:$0xf]
        %v984 = vld [vmem:[#allocation8 + $0xc] sm:$0xf]
        %v985 = vld [vmem:[#allocation8 + $0x10] sm:$0xf]
        %v986 = vld [vmem:[#allocation8 + $0x14] sm:$0xf]
        %v987 = vld [vmem:[#allocation8 + $0x18] sm:$0xf]
        %v988 = vld [vmem:[#allocation8 + $0x1c] sm:$0xf]
        %v989 = vld [vmem:[#allocation8 + $0x20] sm:$0xf]
        %v990 = vld [vmem:[#allocation8 + $0x24] sm:$0xf]
        %v991 = vld [vmem:[#allocation8 + $0x28] sm:$0xf]
        %v992 = vld [vmem:[#allocation8 + $0x2c] sm:$0xf]
        %v993 = vld [vmem:[#allocation8 + $0x30] sm:$0xf]
        %v994 = vld [vmem:[#allocation8 + $0x34] sm:$0xf]
        %v995 = vld [vmem:[#allocation8 + $0x38] sm:$0xf]
        %v996 = vld [vmem:[#allocation8 + $0x3c] sm:$0xf]
        %v997 = vld [vmem:[#allocation8 + $0x40] sm:$0xf]
        %v998 = vld [vmem:[#allocation8 + $0x44] sm:$0xf]
        %v999 = vld [vmem:[#allocation8 + $0x48] sm:$0xf]
        %v1000 = vld [vmem:[#allocation8 + $0x4c] sm:$0xf]
        %v1001 = vld [vmem:[#allocation8 + $0x50] sm:$0xf]
        %v1002 = vld [vmem:[#allocation8 + $0x54] sm:$0xf]
        %v1003 = vld [vmem:[#allocation8 + $0x58] sm:$0xf]
        %v1004 = vld [vmem:[#allocation8 + $0x5c] sm:$0xf]
        %v1005 = vld [vmem:[#allocation8 + $0x60] sm:$0xf]
        %v1006 = vld [vmem:[#allocation8 + $0x64] sm:$0xf]
        %v1007 = vld [vmem:[#allocation8 + $0x68] sm:$0xf]
        %v1008 = vld [vmem:[#allocation8 + $0x6c] sm:$0xf]
        %v1009 = vld [vmem:[#allocation8 + $0x70] sm:$0xf]
        %v1010 = vld [vmem:[#allocation8 + $0x74] sm:$0xf]
        %v1011 = vld [vmem:[#allocation8 + $0x78] sm:$0xf]
        %v1012 = vld [vmem:[#allocation8 + $0x7c] sm:$0xf]
        %v1013 = vld [vmem:[#allocation8 + $0x80] sm:$0xf]
        %v1014 = vld [vmem:[#allocation8 + $0x84] sm:$0xf]
        %v1015 = vld [vmem:[#allocation8 + $0x88] sm:$0xf]
        %v1016 = vld [vmem:[#allocation8 + $0x8c] sm:$0xf]
        %v1017 = vld [vmem:[#allocation8 + $0x90] sm:$0xf]
        %v1018 = vld [vmem:[#allocation8 + $0x94] sm:$0xf]
        %v1019 = vld [vmem:[#allocation8 + $0x98] sm:$0xf]
        %v1020 = vld [vmem:[#allocation8 + $0x9c] sm:$0xf]
        %v1021 = vld [vmem:[#allocation8 + $0xa0] sm:$0xf]
        %v1022 = vld [vmem:[#allocation8 + $0xa4] sm:$0xf]
        %v1023 = vld [vmem:[#allocation8 + $0xa8] sm:$0xf]
        %v1024 = vld [vmem:[#allocation8 + $0xac] sm:$0xf]
        %v1025 = vld [vmem:[#allocation8 + $0xb0] sm:$0xf]
        %v1026 = vld [vmem:[#allocation8 + $0xb4] sm:$0xf]
        %v1027 = vld [vmem:[#allocation8 + $0xb8] sm:$0xf]
        %v1028 = vld [vmem:[#allocation8 + $0xbc] sm:$0xf]
        %v1029 = vld [vmem:[%s9] sm:$0x1]
        %v1030 = vlaneseq
        %v1031 = vshrl.u32 %v1030, 7
        %v1032 = vsub.s32 0, %v1031
        %v1033 = vrot.slane %v1029, %v1032
        %v1082 = vunpack.c.l.b16 %v981
        %v1083 = vunpack.c.l.b16 %v982
        %v1084 = vunpack.c.l.b16 %v983
        %v1085 = vunpack.c.l.b16 %v984
        %v1086 = vunpack.c.l.b16 %v985
        %v1087 = vunpack.c.l.b16 %v986
        %v1088 = vunpack.c.l.b16 %v987
        %v1089 = vunpack.c.l.b16 %v988
        %v1090 = vunpack.c.l.b16 %v989
        %v1091 = vunpack.c.l.b16 %v990
        %v1092 = vunpack.c.l.b16 %v991
        %v1093 = vunpack.c.l.b16 %v992
        %v1094 = vunpack.c.l.b16 %v993
        %v1095 = vunpack.c.l.b16 %v994
        %v1096 = vunpack.c.l.b16 %v995
        %v1097 = vunpack.c.l.b16 %v996
        %v1098 = vunpack.c.l.b16 %v997
        %v1099 = vunpack.c.l.b16 %v998
        %v1100 = vunpack.c.l.b16 %v999
        %v1101 = vunpack.c.l.b16 %v1000
        %v1102 = vunpack.c.l.b16 %v1001
        %v1103 = vunpack.c.l.b16 %v1002
        %v1104 = vunpack.c.l.b16 %v1003
        %v1105 = vunpack.c.l.b16 %v1004
        %v1106 = vunpack.c.l.b16 %v1005
        %v1107 = vunpack.c.l.b16 %v1006
        %v1108 = vunpack.c.l.b16 %v1007
        %v1109 = vunpack.c.l.b16 %v1008
        %v1110 = vunpack.c.l.b16 %v1009
        %v1111 = vunpack.c.l.b16 %v1010
        %v1112 = vunpack.c.l.b16 %v1011
        %v1113 = vunpack.c.l.b16 %v1012
        %v1114 = vunpack.c.l.b16 %v1013
        %v1115 = vunpack.c.l.b16 %v1014
        %v1116 = vunpack.c.l.b16 %v1015
        %v1117 = vunpack.c.l.b16 %v1016
        %v1118 = vunpack.c.l.b16 %v1017
        %v1119 = vunpack.c.l.b16 %v1018
        %v1120 = vunpack.c.l.b16 %v1019
        %v1121 = vunpack.c.l.b16 %v1020
        %v1122 = vunpack.c.l.b16 %v1021
        %v1123 = vunpack.c.l.b16 %v1022
        %v1124 = vunpack.c.l.b16 %v1023
        %v1125 = vunpack.c.l.b16 %v1024
        %v1126 = vunpack.c.l.b16 %v1025
        %v1127 = vunpack.c.l.b16 %v1026
        %v1128 = vunpack.c.l.b16 %v1027
        %v1129 = vunpack.c.l.b16 %v1028
        %v1130 = vpack.c.b16 %v1083, %v1082
        %v1131 = vpack.c.b16 %v1085, %v1084
        %v1132 = vpack.c.b16 %v1087, %v1086
        %v1133 = vpack.c.b16 %v1089, %v1088
        %v1134 = vpack.c.b16 %v1091, %v1090
        %v1135 = vpack.c.b16 %v1093, %v1092
        %v1136 = vpack.c.b16 %v1095, %v1094
        %v1137 = vpack.c.b16 %v1097, %v1096
        %v1138 = vpack.c.b16 %v1099, %v1098
        %v1139 = vpack.c.b16 %v1101, %v1100
        %v1140 = vpack.c.b16 %v1103, %v1102
        %v1141 = vpack.c.b16 %v1105, %v1104
        %v1142 = vpack.c.b16 %v1107, %v1106
        %v1143 = vpack.c.b16 %v1109, %v1108
        %v1144 = vpack.c.b16 %v1111, %v1110
        %v1145 = vpack.c.b16 %v1113, %v1112
        %v1146 = vpack.c.b16 %v1115, %v1114
        %v1147 = vpack.c.b16 %v1117, %v1116
        %v1148 = vpack.c.b16 %v1119, %v1118
        %v1149 = vpack.c.b16 %v1121, %v1120
        %v1150 = vpack.c.b16 %v1123, %v1122
        %v1151 = vpack.c.b16 %v1125, %v1124
        %v1152 = vpack.c.b16 %v1127, %v1126
        %v1153 = vpack.c.b16 %v1129, %v1128
        %1178 = vmatprep.subr.bf16.mxu0 0
        %1179 = vmatpush1.bf16.msra.mxu0 %v1137
        %1180 = vmatprep.subr.bf16.mxu0 0
        %1181 = vmatpush1.bf16.msra.mxu0 %v1136
        %1182 = vmatprep.subr.bf16.mxu0 0
        %1183 = vmatpush1.bf16.msra.mxu0 %v1135
        %1184 = vmatprep.subr.bf16.mxu0 0
        %1185 = vmatpush1.bf16.msra.mxu0 %v1134
        %1186 = vmatprep.subr.bf16.mxu0 0
        %1187 = vmatpush1.bf16.msra.mxu0 %v1133
        %1188 = vmatprep.subr.bf16.mxu0 0
        %1189 = vmatpush1.bf16.msra.mxu0 %v1132
        %1190 = vmatprep.subr.bf16.mxu0 0
        %1191 = vmatpush1.bf16.msra.mxu0 %v1131
        %1192 = vmatprep.subr.bf16.mxu0 0
        %1193 = vmatpush1.bf16.msra.mxu0 %v1130
        %1194 = vmatprep.subr.bf16.mxu0 0
        %1195 = vmatpush2.bf16.msra.mxu0 %v1145
        %1196 = vmatprep.subr.bf16.mxu0 0
        %1197 = vmatpush2.bf16.msra.mxu0 %v1144
        %1198 = vmatprep.subr.bf16.mxu0 0
        %1199 = vmatpush2.bf16.msra.mxu0 %v1143
        %1200 = vmatprep.subr.bf16.mxu0 0
        %1201 = vmatpush2.bf16.msra.mxu0 %v1142
        %1202 = vmatprep.subr.bf16.mxu0 0
        %1203 = vmatpush2.bf16.msra.mxu0 %v1141
        %1204 = vmatprep.subr.bf16.mxu0 0
        %1205 = vmatpush2.bf16.msra.mxu0 %v1140
        %1206 = vmatprep.subr.bf16.mxu0 0
        %1207 = vmatpush2.bf16.msra.mxu0 %v1139
        %1208 = vmatprep.subr.bf16.mxu0 0
        %1209 = vmatpush2.bf16.msra.mxu0 %v1138
        %1210 = vmatprep.mubr.bf16.mxu0 %v976
        %1211 = vmatmul.mubr.bf16.gmra.mxu0 %v975
        %v1212 = vpop.f32.mrf.mxu0
        %v1213 = vadd.f32 %v1033, %v1212
        %v1214 = vpop.f32.mrf.mxu0
        %v1215 = vpop.f32.mrf.mxu0
        %v1216 = vadd.f32 %v1033, %v1215
        %v1217 = vpop.f32.mrf.mxu0
        %1218 = vmatprep.mubr.bf16.mxu0 %v979
        %1219 = vmatmul.mubr.bf16.gmra.mxu0 %v978
        %v1220 = vpop.f32.mrf.mxu0
        %v1221 = vadd.f32 %v1033, %v1220
        %v1222 = vpop.f32.mrf.mxu0
        %v1223 = vpop.f32.mrf.mxu0
        %v1224 = vadd.f32 %v1033, %v1223
        %v1225 = vpop.f32.mrf.mxu0
        %1226 = vdwg.mxu0
        %1227 = vmatprep.subr.bf16.mxu0 0
        %1228 = vmatpush1.bf16.msra.mxu0 %v1153
        %1229 = vmatprep.subr.bf16.mxu0 0
        %1230 = vmatpush1.bf16.msra.mxu0 %v1152
        %1231 = vmatprep.subr.bf16.mxu0 0
        %1232 = vmatpush1.bf16.msra.mxu0 %v1151
        %1233 = vmatprep.subr.bf16.mxu0 0
        %1234 = vmatpush1.bf16.msra.mxu0 %v1150
        %1235 = vmatprep.subr.bf16.mxu0 0
        %1236 = vmatpush1.bf16.msra.mxu0 %v1149
        %1237 = vmatprep.subr.bf16.mxu0 0
        %1238 = vmatpush1.bf16.msra.mxu0 %v1148
        %1239 = vmatprep.subr.bf16.mxu0 0
        %1240 = vmatpush1.bf16.msra.mxu0 %v1147
        %1241 = vmatprep.subr.bf16.mxu0 0
        %1242 = vmatpush1.bf16.msra.mxu0 %v1146
        %1243 = vmatprep.subr.bf16.mxu0 0
        %1244 = vmatpush2.bf16.msra.mxu0 0
        %1245 = vmatprep.subr.bf16.mxu0 0
        %1246 = vmatpush2.bf16.msra.mxu0 0
        %1247 = vmatprep.subr.bf16.mxu0 0
        %1248 = vmatpush2.bf16.msra.mxu0 0
        %1249 = vmatprep.subr.bf16.mxu0 0
        %1250 = vmatpush2.bf16.msra.mxu0 0
        %1251 = vmatprep.subr.bf16.mxu0 0
        %1252 = vmatpush2.bf16.msra.mxu0 0
        %1253 = vmatprep.subr.bf16.mxu0 0
        %1254 = vmatpush2.bf16.msra.mxu0 0
        %1255 = vmatprep.subr.bf16.mxu0 0
        %1256 = vmatpush2.bf16.msra.mxu0 0
        %1257 = vmatprep.subr.bf16.mxu0 0
        %1258 = vmatpush2.bf16.msra.mxu0 0
        %1259 = vmatprep.mubr.bf16.mxu0 0
        %1260 = vmatmul.mubr.bf16.gmra.mxu0 %v977
        %v1261 = vpop.f32.mrf.mxu0
        %v1262 = vadd.f32 %v1213, %v1261
        %v1263 = vpop.f32.mrf.mxu0
        %v1264 = vpop.f32.mrf.mxu0
        %v1265 = vadd.f32 %v1216, %v1264
        %v1266 = vpop.f32.mrf.mxu0
        %1267 = vmatprep.mubr.bf16.mxu0 0
        %1268 = vmatmul.mubr.bf16.gmra.mxu0 %v980
        %v1269 = vpop.f32.mrf.mxu0
        %v1270 = vadd.f32 %v1221, %v1269
        %v1271 = vpop.f32.mrf.mxu0
        %v1272 = vpop.f32.mrf.mxu0
        %v1273 = vadd.f32 %v1224, %v1272
        %v1274 = vpop.f32.mrf.mxu0
        %1275 = vdwg.mxu0
        %1276 = vadd.xlane.f32.xlu0 %v1262
        %v1277 = vpop.xlane.xlu0 %1276
        %1278 = vadd.xlane.f32.xlu0 %v1265
        %v1279 = vpop.xlane.xlu0 %1278
        %1280 = vadd.xlane.f32.xlu0 %v1270
        %v1281 = vpop.xlane.xlu0 %1280
        %1282 = vadd.xlane.f32.xlu0 %v1273
        %v1283 = vpop.xlane.xlu0 %1282
        %v1284 = vmul.f32 %v1277, %v900
        %v1285 = vmul.f32 %v1279, %v900
        %v1286 = vmul.f32 %v1281, %v900
        %v1287 = vmul.f32 %v1283, %v900
        %v1288 = vsub.f32 %v1262, %v1284
        %v1289 = vsub.f32 %v1265, %v1285
        %v1290 = vsub.f32 %v1270, %v1286
        %v1291 = vsub.f32 %v1273, %v1287
        %v1292 = vmul.f32 %v1288, %v1288
        %v1293 = vmul.f32 %v1289, %v1289
        %v1294 = vmul.f32 %v1290, %v1290
        %v1295 = vmul.f32 %v1291, %v1291
        %1296 = vadd.xlane.f32.xlu0 %v1292
        %v1297 = vpop.xlane.xlu0 %1296
        %1298 = vadd.xlane.f32.xlu0 %v1293
        %v1299 = vpop.xlane.xlu0 %1298
        %1300 = vadd.xlane.f32.xlu0 %v1294
        %v1301 = vpop.xlane.xlu0 %1300
        %1302 = vadd.xlane.f32.xlu0 %v1295
        %v1303 = vpop.xlane.xlu0 %1302
        %v1304 = vmul.f32 %v1297, %v900
        %v1305 = vmul.f32 %v1299, %v900
        %v1306 = vmul.f32 %v1301, %v900
        %v1307 = vmul.f32 %v1303, %v900
        %v1308 = vadd.f32 %v1304, 1e-08
        %v1309 = vadd.f32 %v1305, 1e-08
        %v1310 = vadd.f32 %v1306, 1e-08
        %v1311 = vadd.f32 %v1307, 1e-08
        %v1312 = vrsqrt.pop %v1308
        %v1313 = vrsqrt.pop %v1309
        %v1314 = vrsqrt.pop %v1310
        %v1315 = vrsqrt.pop %v1311
        %v1316 = vmul.f32 %v1288, %v1312
        %v1317 = vmul.f32 %v1289, %v1313
        %v1318 = vmul.f32 %v1290, %v1314
        %v1319 = vmul.f32 %v1291, %v1315
        %v1320 = vld [vmem:[%s10] sm:$0x1]
        %v1321 = vlaneseq
        %v1322 = vshrl.u32 %v1321, 7
        %v1323 = vsub.s32 0, %v1322
        %v1324 = vrot.slane %v1320, %v1323
        %v1325 = vmul.f32 %v1316, %v1324
        %v1326 = vmul.f32 %v1317, %v1324
        %v1327 = vmul.f32 %v1318, %v1324
        %v1328 = vmul.f32 %v1319, %v1324
        %v1329 = vld [vmem:[%s11] sm:$0x1]
        %v1330 = vlaneseq
        %v1331 = vshrl.u32 %v1330, 7
        %v1332 = vsub.s32 0, %v1331
        %v1333 = vrot.slane %v1329, %v1332
        %v1334 = vadd.f32 %v1325, %v1333
        %v1335 = vadd.f32 %v1326, %v1333
        %v1336 = vadd.f32 %v1327, %v1333
        %v1337 = vadd.f32 %v1328, %v1333
        %v1338 = vmax.f32 %v1334, 0.0
        %v1339 = vmax.f32 %v1335, 0.0
        %v1340 = vmax.f32 %v1336, 0.0
        %v1341 = vmax.f32 %v1337, 0.0
        %s1342 = sld [smem:[#allocation4]]
        %v1343 = vstv %s1342
        %v1344 = vmul.f32 %v1343, %v1338
        %v1345 = vmul.f32 %v1343, %v1339
        %v1346 = vmul.f32 %v1343, %v1340
        %v1347 = vmul.f32 %v1343, %v1341
        %v1348 = vadd.f32 %v1344, %v561
        %v1349 = vadd.f32 %v1345, %v564
        %v1350 = vadd.f32 %v1346, %v569
        %v1351 = vadd.f32 %v1347, %v572
        %1352 = vst [vmem:[#allocation2 + $0x10] sm:$0xff] %v1348
        %1353 = vst [vmem:[#allocation2 + $0x18] sm:$0xff] %v1349
        %1354 = vst [vmem:[#allocation2 + $0x20] sm:$0xff] %v1350
        %1355 = vst [vmem:[#allocation2 + $0x28] sm:$0xff] %v1351
        %v1356 = vld [vmem:[#allocation2 + $0x8] sm:$0xff]
        %v1357 = vld [vmem:[#allocation2 + $0x10] sm:$0xff]
        %v1358 = vld [vmem:[#allocation2 + $0x18] sm:$0xff]
        %v1359 = vld [vmem:[#allocation2 + $0x20] sm:$0xff]
        %v1360 = vld [vmem:[#allocation2 + $0xc] sm:$0xff]
        %v1361 = vld [vmem:[#allocation2 + $0x14] sm:$0xff]
        %v1362 = vld [vmem:[#allocation2 + $0x1c] sm:$0xff]
        %v1363 = vld [vmem:[#allocation2 + $0x24] sm:$0xff]
        %v1364 = vld [vmem:[#allocation2 + $0x10] sm:$0xff]
        %v1365 = vld [vmem:[#allocation2 + $0x18] sm:$0xff]
        %v1366 = vld [vmem:[#allocation2 + $0x20] sm:$0xff]
        %v1367 = vld [vmem:[#allocation2 + $0x28] sm:$0xff]
        %v1368 = vpack.c.bf16 %v1357, %v1356
        %v1369 = vpack.c.bf16 %v1361, %v1360
        %v1370 = vpack.c.bf16 %v1365, %v1364
        %v1371 = vpack.c.bf16 %v1359, %v1358
        %v1372 = vpack.c.bf16 %v1363, %v1362
        %v1373 = vpack.c.bf16 %v1367, %v1366
        %s1374 = scalar_lea.vmem [#allocation5], 192
        %v1375 = vld [vmem:[%s1374] sm:$0xf]
        %v1376 = vld [vmem:[%s1374 + $0x4] sm:$0xf]
        %v1377 = vld [vmem:[%s1374 + $0x8] sm:$0xf]
        %v1378 = vld [vmem:[%s1374 + $0xc] sm:$0xf]
        %v1379 = vld [vmem:[%s1374 + $0x10] sm:$0xf]
        %v1380 = vld [vmem:[%s1374 + $0x14] sm:$0xf]
        %v1381 = vld [vmem:[%s1374 + $0x18] sm:$0xf]
        %v1382 = vld [vmem:[%s1374 + $0x1c] sm:$0xf]
        %v1383 = vld [vmem:[%s1374 + $0x20] sm:$0xf]
        %v1384 = vld [vmem:[%s1374 + $0x24] sm:$0xf]
        %v1385 = vld [vmem:[%s1374 + $0x28] sm:$0xf]
        %v1386 = vld [vmem:[%s1374 + $0x2c] sm:$0xf]
        %v1387 = vld [vmem:[%s1374 + $0x30] sm:$0xf]
        %v1388 = vld [vmem:[%s1374 + $0x34] sm:$0xf]
        %v1389 = vld [vmem:[%s1374 + $0x38] sm:$0xf]
        %v1390 = vld [vmem:[%s1374 + $0x3c] sm:$0xf]
        %v1391 = vld [vmem:[%s1374 + $0x40] sm:$0xf]
        %v1392 = vld [vmem:[%s1374 + $0x44] sm:$0xf]
        %v1393 = vld [vmem:[%s1374 + $0x48] sm:$0xf]
        %v1394 = vld [vmem:[%s1374 + $0x4c] sm:$0xf]
        %v1395 = vld [vmem:[%s1374 + $0x50] sm:$0xf]
        %v1396 = vld [vmem:[%s1374 + $0x54] sm:$0xf]
        %v1397 = vld [vmem:[%s1374 + $0x58] sm:$0xf]
        %v1398 = vld [vmem:[%s1374 + $0x5c] sm:$0xf]
        %v1399 = vld [vmem:[%s1374 + $0x60] sm:$0xf]
        %v1400 = vld [vmem:[%s1374 + $0x64] sm:$0xf]
        %v1401 = vld [vmem:[%s1374 + $0x68] sm:$0xf]
        %v1402 = vld [vmem:[%s1374 + $0x6c] sm:$0xf]
        %v1403 = vld [vmem:[%s1374 + $0x70] sm:$0xf]
        %v1404 = vld [vmem:[%s1374 + $0x74] sm:$0xf]
        %v1405 = vld [vmem:[%s1374 + $0x78] sm:$0xf]
        %v1406 = vld [vmem:[%s1374 + $0x7c] sm:$0xf]
        %v1407 = vld [vmem:[%s1374 + $0x80] sm:$0xf]
        %v1408 = vld [vmem:[%s1374 + $0x84] sm:$0xf]
        %v1409 = vld [vmem:[%s1374 + $0x88] sm:$0xf]
        %v1410 = vld [vmem:[%s1374 + $0x8c] sm:$0xf]
        %v1411 = vld [vmem:[%s1374 + $0x90] sm:$0xf]
        %v1412 = vld [vmem:[%s1374 + $0x94] sm:$0xf]
        %v1413 = vld [vmem:[%s1374 + $0x98] sm:$0xf]
        %v1414 = vld [vmem:[%s1374 + $0x9c] sm:$0xf]
        %v1415 = vld [vmem:[%s1374 + $0xa0] sm:$0xf]
        %v1416 = vld [vmem:[%s1374 + $0xa4] sm:$0xf]
        %v1417 = vld [vmem:[%s1374 + $0xa8] sm:$0xf]
        %v1418 = vld [vmem:[%s1374 + $0xac] sm:$0xf]
        %v1419 = vld [vmem:[%s1374 + $0xb0] sm:$0xf]
        %v1420 = vld [vmem:[%s1374 + $0xb4] sm:$0xf]
        %v1421 = vld [vmem:[%s1374 + $0xb8] sm:$0xf]
        %v1422 = vld [vmem:[%s1374 + $0xbc] sm:$0xf]
        %v1423 = vld [vmem:[%s5 + $0x1] sm:$0x1]
        %v1424 = vlaneseq
        %v1425 = vshrl.u32 %v1424, 7
        %v1426 = vsub.s32 0, %v1425
        %v1427 = vrot.slane %v1423, %v1426
        %v1476 = vunpack.c.l.b16 %v1375
        %v1477 = vunpack.c.l.b16 %v1376
        %v1478 = vunpack.c.l.b16 %v1377
        %v1479 = vunpack.c.l.b16 %v1378
        %v1480 = vunpack.c.l.b16 %v1379
        %v1481 = vunpack.c.l.b16 %v1380
        %v1482 = vunpack.c.l.b16 %v1381
        %v1483 = vunpack.c.l.b16 %v1382
        %v1484 = vunpack.c.l.b16 %v1383
        %v1485 = vunpack.c.l.b16 %v1384
        %v1486 = vunpack.c.l.b16 %v1385
        %v1487 = vunpack.c.l.b16 %v1386
        %v1488 = vunpack.c.l.b16 %v1387
        %v1489 = vunpack.c.l.b16 %v1388
        %v1490 = vunpack.c.l.b16 %v1389
        %v1491 = vunpack.c.l.b16 %v1390
        %v1492 = vunpack.c.l.b16 %v1391
        %v1493 = vunpack.c.l.b16 %v1392
        %v1494 = vunpack.c.l.b16 %v1393
        %v1495 = vunpack.c.l.b16 %v1394
        %v1496 = vunpack.c.l.b16 %v1395
        %v1497 = vunpack.c.l.b16 %v1396
        %v1498 = vunpack.c.l.b16 %v1397
        %v1499 = vunpack.c.l.b16 %v1398
        %v1500 = vunpack.c.l.b16 %v1399
        %v1501 = vunpack.c.l.b16 %v1400
        %v1502 = vunpack.c.l.b16 %v1401
        %v1503 = vunpack.c.l.b16 %v1402
        %v1504 = vunpack.c.l.b16 %v1403
        %v1505 = vunpack.c.l.b16 %v1404
        %v1506 = vunpack.c.l.b16 %v1405
        %v1507 = vunpack.c.l.b16 %v1406
        %v1508 = vunpack.c.l.b16 %v1407
        %v1509 = vunpack.c.l.b16 %v1408
        %v1510 = vunpack.c.l.b16 %v1409
        %v1511 = vunpack.c.l.b16 %v1410
        %v1512 = vunpack.c.l.b16 %v1411
        %v1513 = vunpack.c.l.b16 %v1412
        %v1514 = vunpack.c.l.b16 %v1413
        %v1515 = vunpack.c.l.b16 %v1414
        %v1516 = vunpack.c.l.b16 %v1415
        %v1517 = vunpack.c.l.b16 %v1416
        %v1518 = vunpack.c.l.b16 %v1417
        %v1519 = vunpack.c.l.b16 %v1418
        %v1520 = vunpack.c.l.b16 %v1419
        %v1521 = vunpack.c.l.b16 %v1420
        %v1522 = vunpack.c.l.b16 %v1421
        %v1523 = vunpack.c.l.b16 %v1422
        %v1524 = vpack.c.b16 %v1477, %v1476
        %v1525 = vpack.c.b16 %v1479, %v1478
        %v1526 = vpack.c.b16 %v1481, %v1480
        %v1527 = vpack.c.b16 %v1483, %v1482
        %v1528 = vpack.c.b16 %v1485, %v1484
        %v1529 = vpack.c.b16 %v1487, %v1486
        %v1530 = vpack.c.b16 %v1489, %v1488
        %v1531 = vpack.c.b16 %v1491, %v1490
        %v1532 = vpack.c.b16 %v1493, %v1492
        %v1533 = vpack.c.b16 %v1495, %v1494
        %v1534 = vpack.c.b16 %v1497, %v1496
        %v1535 = vpack.c.b16 %v1499, %v1498
        %v1536 = vpack.c.b16 %v1501, %v1500
        %v1537 = vpack.c.b16 %v1503, %v1502
        %v1538 = vpack.c.b16 %v1505, %v1504
        %v1539 = vpack.c.b16 %v1507, %v1506
        %v1540 = vpack.c.b16 %v1509, %v1508
        %v1541 = vpack.c.b16 %v1511, %v1510
        %v1542 = vpack.c.b16 %v1513, %v1512
        %v1543 = vpack.c.b16 %v1515, %v1514
        %v1544 = vpack.c.b16 %v1517, %v1516
        %v1545 = vpack.c.b16 %v1519, %v1518
        %v1546 = vpack.c.b16 %v1521, %v1520
        %v1547 = vpack.c.b16 %v1523, %v1522
        %1572 = vmatprep.subr.bf16.mxu0 0
        %1573 = vmatpush1.bf16.msra.mxu0 %v1531
        %1574 = vmatprep.subr.bf16.mxu0 0
        %1575 = vmatpush1.bf16.msra.mxu0 %v1530
        %1576 = vmatprep.subr.bf16.mxu0 0
        %1577 = vmatpush1.bf16.msra.mxu0 %v1529
        %1578 = vmatprep.subr.bf16.mxu0 0
        %1579 = vmatpush1.bf16.msra.mxu0 %v1528
        %1580 = vmatprep.subr.bf16.mxu0 0
        %1581 = vmatpush1.bf16.msra.mxu0 %v1527
        %1582 = vmatprep.subr.bf16.mxu0 0
        %1583 = vmatpush1.bf16.msra.mxu0 %v1526
        %1584 = vmatprep.subr.bf16.mxu0 0
        %1585 = vmatpush1.bf16.msra.mxu0 %v1525
        %1586 = vmatprep.subr.bf16.mxu0 0
        %1587 = vmatpush1.bf16.msra.mxu0 %v1524
        %1588 = vmatprep.subr.bf16.mxu0 0
        %1589 = vmatpush2.bf16.msra.mxu0 %v1539
        %1590 = vmatprep.subr.bf16.mxu0 0
        %1591 = vmatpush2.bf16.msra.mxu0 %v1538
        %1592 = vmatprep.subr.bf16.mxu0 0
        %1593 = vmatpush2.bf16.msra.mxu0 %v1537
        %1594 = vmatprep.subr.bf16.mxu0 0
        %1595 = vmatpush2.bf16.msra.mxu0 %v1536
        %1596 = vmatprep.subr.bf16.mxu0 0
        %1597 = vmatpush2.bf16.msra.mxu0 %v1535
        %1598 = vmatprep.subr.bf16.mxu0 0
        %1599 = vmatpush2.bf16.msra.mxu0 %v1534
        %1600 = vmatprep.subr.bf16.mxu0 0
        %1601 = vmatpush2.bf16.msra.mxu0 %v1533
        %1602 = vmatprep.subr.bf16.mxu0 0
        %1603 = vmatpush2.bf16.msra.mxu0 %v1532
        %1604 = vmatprep.mubr.bf16.mxu0 %v1369
        %1605 = vmatmul.mubr.bf16.gmra.mxu0 %v1368
        %v1606 = vpop.f32.mrf.mxu0
        %v1607 = vadd.f32 %v1427, %v1606
        %v1608 = vpop.f32.mrf.mxu0
        %v1609 = vpop.f32.mrf.mxu0
        %v1610 = vadd.f32 %v1427, %v1609
        %v1611 = vpop.f32.mrf.mxu0
        %1612 = vmatprep.mubr.bf16.mxu0 %v1372
        %1613 = vmatmul.mubr.bf16.gmra.mxu0 %v1371
        %v1614 = vpop.f32.mrf.mxu0
        %v1615 = vadd.f32 %v1427, %v1614
        %v1616 = vpop.f32.mrf.mxu0
        %v1617 = vpop.f32.mrf.mxu0
        %v1618 = vadd.f32 %v1427, %v1617
        %v1619 = vpop.f32.mrf.mxu0
        %1620 = vdwg.mxu0
        %1621 = vmatprep.subr.bf16.mxu0 0
        %1622 = vmatpush1.bf16.msra.mxu0 %v1547
        %1623 = vmatprep.subr.bf16.mxu0 0
        %1624 = vmatpush1.bf16.msra.mxu0 %v1546
        %1625 = vmatprep.subr.bf16.mxu0 0
        %1626 = vmatpush1.bf16.msra.mxu0 %v1545
        %1627 = vmatprep.subr.bf16.mxu0 0
        %1628 = vmatpush1.bf16.msra.mxu0 %v1544
        %1629 = vmatprep.subr.bf16.mxu0 0
        %1630 = vmatpush1.bf16.msra.mxu0 %v1543
        %1631 = vmatprep.subr.bf16.mxu0 0
        %1632 = vmatpush1.bf16.msra.mxu0 %v1542
        %1633 = vmatprep.subr.bf16.mxu0 0
        %1634 = vmatpush1.bf16.msra.mxu0 %v1541
        %1635 = vmatprep.subr.bf16.mxu0 0
        %1636 = vmatpush1.bf16.msra.mxu0 %v1540
        %1637 = vmatprep.subr.bf16.mxu0 0
        %1638 = vmatpush2.bf16.msra.mxu0 0
        %1639 = vmatprep.subr.bf16.mxu0 0
        %1640 = vmatpush2.bf16.msra.mxu0 0
        %1641 = vmatprep.subr.bf16.mxu0 0
        %1642 = vmatpush2.bf16.msra.mxu0 0
        %1643 = vmatprep.subr.bf16.mxu0 0
        %1644 = vmatpush2.bf16.msra.mxu0 0
        %1645 = vmatprep.subr.bf16.mxu0 0
        %1646 = vmatpush2.bf16.msra.mxu0 0
        %1647 = vmatprep.subr.bf16.mxu0 0
        %1648 = vmatpush2.bf16.msra.mxu0 0
        %1649 = vmatprep.subr.bf16.mxu0 0
        %1650 = vmatpush2.bf16.msra.mxu0 0
        %1651 = vmatprep.subr.bf16.mxu0 0
        %1652 = vmatpush2.bf16.msra.mxu0 0
        %1653 = vmatprep.mubr.bf16.mxu0 0
        %1654 = vmatmul.mubr.bf16.gmra.mxu0 %v1370
        %v1655 = vpop.f32.mrf.mxu0
        %v1656 = vadd.f32 %v1607, %v1655
        %v1657 = vpop.f32.mrf.mxu0
        %v1658 = vpop.f32.mrf.mxu0
        %v1659 = vadd.f32 %v1610, %v1658
        %v1660 = vpop.f32.mrf.mxu0
        %1661 = vmatprep.mubr.bf16.mxu0 0
        %1662 = vmatmul.mubr.bf16.gmra.mxu0 %v1373
        %v1663 = vpop.f32.mrf.mxu0
        %v1664 = vadd.f32 %v1615, %v1663
        %v1665 = vpop.f32.mrf.mxu0
        %v1666 = vpop.f32.mrf.mxu0
        %v1667 = vadd.f32 %v1618, %v1666
        %v1668 = vpop.f32.mrf.mxu0
        %1669 = vdwg.mxu0
        %1670 = vadd.xlane.f32.xlu0 %v1656
        %v1671 = vpop.xlane.xlu0 %1670
        %1672 = vadd.xlane.f32.xlu0 %v1659
        %v1673 = vpop.xlane.xlu0 %1672
        %1674 = vadd.xlane.f32.xlu0 %v1664
        %v1675 = vpop.xlane.xlu0 %1674
        %1676 = vadd.xlane.f32.xlu0 %v1667
        %v1677 = vpop.xlane.xlu0 %1676
        %v1678 = vmul.f32 %v1671, %v900
        %v1679 = vmul.f32 %v1673, %v900
        %v1680 = vmul.f32 %v1675, %v900
        %v1681 = vmul.f32 %v1677, %v900
        %v1682 = vsub.f32 %v1656, %v1678
        %v1683 = vsub.f32 %v1659, %v1679
        %v1684 = vsub.f32 %v1664, %v1680
        %v1685 = vsub.f32 %v1667, %v1681
        %v1686 = vmul.f32 %v1682, %v1682
        %v1687 = vmul.f32 %v1683, %v1683
        %v1688 = vmul.f32 %v1684, %v1684
        %v1689 = vmul.f32 %v1685, %v1685
        %1690 = vadd.xlane.f32.xlu0 %v1686
        %v1691 = vpop.xlane.xlu0 %1690
        %1692 = vadd.xlane.f32.xlu0 %v1687
        %v1693 = vpop.xlane.xlu0 %1692
        %1694 = vadd.xlane.f32.xlu0 %v1688
        %v1695 = vpop.xlane.xlu0 %1694
        %1696 = vadd.xlane.f32.xlu0 %v1689
        %v1697 = vpop.xlane.xlu0 %1696
        %v1698 = vmul.f32 %v1691, %v900
        %v1699 = vmul.f32 %v1693, %v900
        %v1700 = vmul.f32 %v1695, %v900
        %v1701 = vmul.f32 %v1697, %v900
        %v1702 = vadd.f32 %v1698, 1e-08
        %v1703 = vadd.f32 %v1699, 1e-08
        %v1704 = vadd.f32 %v1700, 1e-08
        %v1705 = vadd.f32 %v1701, 1e-08
        %v1706 = vrsqrt.pop %v1702
        %v1707 = vrsqrt.pop %v1703
        %v1708 = vrsqrt.pop %v1704
        %v1709 = vrsqrt.pop %v1705
        %v1710 = vmul.f32 %v1682, %v1706
        %v1711 = vmul.f32 %v1683, %v1707
        %v1712 = vmul.f32 %v1684, %v1708
        %v1713 = vmul.f32 %v1685, %v1709
        %v1714 = vld [vmem:[%s6 + $0x1] sm:$0x1]
        %v1715 = vlaneseq
        %v1716 = vshrl.u32 %v1715, 7
        %v1717 = vsub.s32 0, %v1716
        %v1718 = vrot.slane %v1714, %v1717
        %v1719 = vmul.f32 %v1710, %v1718
        %v1720 = vmul.f32 %v1711, %v1718
        %v1721 = vmul.f32 %v1712, %v1718
        %v1722 = vmul.f32 %v1713, %v1718
        %v1723 = vld [vmem:[%s7 + $0x1] sm:$0x1]
        %v1724 = vlaneseq
        %v1725 = vshrl.u32 %v1724, 7
        %v1726 = vsub.s32 0, %v1725
        %v1727 = vrot.slane %v1723, %v1726
        %v1728 = vadd.f32 %v1719, %v1727
        %v1729 = vadd.f32 %v1720, %v1727
        %v1730 = vadd.f32 %v1721, %v1727
        %v1731 = vadd.f32 %v1722, %v1727
        %v1732 = vmax.f32 %v1728, 0.0
        %v1733 = vmax.f32 %v1729, 0.0
        %v1734 = vmax.f32 %v1730, 0.0
        %v1735 = vmax.f32 %v1731, 0.0
        %1736 = vst [vmem:[#allocation2 + $0x10] sm:$0xff] %v1732
        %1737 = vst [vmem:[#allocation2 + $0x18] sm:$0xff] %v1733
        %1738 = vst [vmem:[#allocation2 + $0x20] sm:$0xff] %v1734
        %1739 = vst [vmem:[#allocation2 + $0x28] sm:$0xff] %v1735
        %v1740 = vld [vmem:[#allocation2] sm:$0xff]
        %v1741 = vld [vmem:[#allocation2 + $0x8] sm:$0xff]
        %v1742 = vld [vmem:[#allocation2 + $0x10] sm:$0xff]
        %v1743 = vld [vmem:[#allocation2 + $0x18] sm:$0xff]
        %v1744 = vld [vmem:[#allocation2 + $0x20] sm:$0xff]
        %v1745 = vld [vmem:[#allocation2 + $0x10] sm:$0xff]
        %v1746 = vld [vmem:[#allocation2 + $0x18] sm:$0xff]
        %v1747 = vld [vmem:[#allocation2 + $0x20] sm:$0xff]
        %v1748 = vld [vmem:[#allocation2 + $0x28] sm:$0xff]
        %v1749 = vpack.c.bf16 %v1741, %v1740
        %v1750 = vpack.c.bf16 %v1742, %v1741
        %v1751 = vpack.c.bf16 %v1746, %v1745
        %v1752 = vpack.c.bf16 %v1743, %v1742
        %v1753 = vpack.c.bf16 %v1744, %v1743
        %v1754 = vpack.c.bf16 %v1748, %v1747
        %s1755 = scalar_lea.vmem [#allocation8], 192
        %v1756 = vld [vmem:[%s1755] sm:$0xf]
        %v1757 = vld [vmem:[%s1755 + $0x4] sm:$0xf]
        %v1758 = vld [vmem:[%s1755 + $0x8] sm:$0xf]
        %v1759 = vld [vmem:[%s1755 + $0xc] sm:$0xf]
        %v1760 = vld [vmem:[%s1755 + $0x10] sm:$0xf]
        %v1761 = vld [vmem:[%s1755 + $0x14] sm:$0xf]
        %v1762 = vld [vmem:[%s1755 + $0x18] sm:$0xf]
        %v1763 = vld [vmem:[%s1755 + $0x1c] sm:$0xf]
        %v1764 = vld [vmem:[%s1755 + $0x20] sm:$0xf]
        %v1765 = vld [vmem:[%s1755 + $0x24] sm:$0xf]
        %v1766 = vld [vmem:[%s1755 + $0x28] sm:$0xf]
        %v1767 = vld [vmem:[%s1755 + $0x2c] sm:$0xf]
        %v1768 = vld [vmem:[%s1755 + $0x30] sm:$0xf]
        %v1769 = vld [vmem:[%s1755 + $0x34] sm:$0xf]
        %v1770 = vld [vmem:[%s1755 + $0x38] sm:$0xf]
        %v1771 = vld [vmem:[%s1755 + $0x3c] sm:$0xf]
        %v1772 = vld [vmem:[%s1755 + $0x40] sm:$0xf]
        %v1773 = vld [vmem:[%s1755 + $0x44] sm:$0xf]
        %v1774 = vld [vmem:[%s1755 + $0x48] sm:$0xf]
        %v1775 = vld [vmem:[%s1755 + $0x4c] sm:$0xf]
        %v1776 = vld [vmem:[%s1755 + $0x50] sm:$0xf]
        %v1777 = vld [vmem:[%s1755 + $0x54] sm:$0xf]
        %v1778 = vld [vmem:[%s1755 + $0x58] sm:$0xf]
        %v1779 = vld [vmem:[%s1755 + $0x5c] sm:$0xf]
        %v1780 = vld [vmem:[%s1755 + $0x60] sm:$0xf]
        %v1781 = vld [vmem:[%s1755 + $0x64] sm:$0xf]
        %v1782 = vld [vmem:[%s1755 + $0x68] sm:$0xf]
        %v1783 = vld [vmem:[%s1755 + $0x6c] sm:$0xf]
        %v1784 = vld [vmem:[%s1755 + $0x70] sm:$0xf]
        %v1785 = vld [vmem:[%s1755 + $0x74] sm:$0xf]
        %v1786 = vld [vmem:[%s1755 + $0x78] sm:$0xf]
        %v1787 = vld [vmem:[%s1755 + $0x7c] sm:$0xf]
        %v1788 = vld [vmem:[%s1755 + $0x80] sm:$0xf]
        %v1789 = vld [vmem:[%s1755 + $0x84] sm:$0xf]
        %v1790 = vld [vmem:[%s1755 + $0x88] sm:$0xf]
        %v1791 = vld [vmem:[%s1755 + $0x8c] sm:$0xf]
        %v1792 = vld [vmem:[%s1755 + $0x90] sm:$0xf]
        %v1793 = vld [vmem:[%s1755 + $0x94] sm:$0xf]
        %v1794 = vld [vmem:[%s1755 + $0x98] sm:$0xf]
        %v1795 = vld [vmem:[%s1755 + $0x9c] sm:$0xf]
        %v1796 = vld [vmem:[%s1755 + $0xa0] sm:$0xf]
        %v1797 = vld [vmem:[%s1755 + $0xa4] sm:$0xf]
        %v1798 = vld [vmem:[%s1755 + $0xa8] sm:$0xf]
        %v1799 = vld [vmem:[%s1755 + $0xac] sm:$0xf]
        %v1800 = vld [vmem:[%s1755 + $0xb0] sm:$0xf]
        %v1801 = vld [vmem:[%s1755 + $0xb4] sm:$0xf]
        %v1802 = vld [vmem:[%s1755 + $0xb8] sm:$0xf]
        %v1803 = vld [vmem:[%s1755 + $0xbc] sm:$0xf]
        %v1804 = vld [vmem:[%s9 + $0x1] sm:$0x1]
        %v1805 = vlaneseq
        %v1806 = vshrl.u32 %v1805, 7
        %v1807 = vsub.s32 0, %v1806
        %v1808 = vrot.slane %v1804, %v1807
        %v1857 = vunpack.c.l.b16 %v1756
        %v1858 = vunpack.c.l.b16 %v1757
        %v1859 = vunpack.c.l.b16 %v1758
        %v1860 = vunpack.c.l.b16 %v1759
        %v1861 = vunpack.c.l.b16 %v1760
        %v1862 = vunpack.c.l.b16 %v1761
        %v1863 = vunpack.c.l.b16 %v1762
        %v1864 = vunpack.c.l.b16 %v1763
        %v1865 = vunpack.c.l.b16 %v1764
        %v1866 = vunpack.c.l.b16 %v1765
        %v1867 = vunpack.c.l.b16 %v1766
        %v1868 = vunpack.c.l.b16 %v1767
        %v1869 = vunpack.c.l.b16 %v1768
        %v1870 = vunpack.c.l.b16 %v1769
        %v1871 = vunpack.c.l.b16 %v1770
        %v1872 = vunpack.c.l.b16 %v1771
        %v1873 = vunpack.c.l.b16 %v1772
        %v1874 = vunpack.c.l.b16 %v1773
        %v1875 = vunpack.c.l.b16 %v1774
        %v1876 = vunpack.c.l.b16 %v1775
        %v1877 = vunpack.c.l.b16 %v1776
        %v1878 = vunpack.c.l.b16 %v1777
        %v1879 = vunpack.c.l.b16 %v1778
        %v1880 = vunpack.c.l.b16 %v1779
        %v1881 = vunpack.c.l.b16 %v1780
        %v1882 = vunpack.c.l.b16 %v1781
        %v1883 = vunpack.c.l.b16 %v1782
        %v1884 = vunpack.c.l.b16 %v1783
        %v1885 = vunpack.c.l.b16 %v1784
        %v1886 = vunpack.c.l.b16 %v1785
        %v1887 = vunpack.c.l.b16 %v1786
        %v1888 = vunpack.c.l.b16 %v1787
        %v1889 = vunpack.c.l.b16 %v1788
        %v1890 = vunpack.c.l.b16 %v1789
        %v1891 = vunpack.c.l.b16 %v1790
        %v1892 = vunpack.c.l.b16 %v1791
        %v1893 = vunpack.c.l.b16 %v1792
        %v1894 = vunpack.c.l.b16 %v1793
        %v1895 = vunpack.c.l.b16 %v1794
        %v1896 = vunpack.c.l.b16 %v1795
        %v1897 = vunpack.c.l.b16 %v1796
        %v1898 = vunpack.c.l.b16 %v1797
        %v1899 = vunpack.c.l.b16 %v1798
        %v1900 = vunpack.c.l.b16 %v1799
        %v1901 = vunpack.c.l.b16 %v1800
        %v1902 = vunpack.c.l.b16 %v1801
        %v1903 = vunpack.c.l.b16 %v1802
        %v1904 = vunpack.c.l.b16 %v1803
        %v1905 = vpack.c.b16 %v1858, %v1857
        %v1906 = vpack.c.b16 %v1860, %v1859
        %v1907 = vpack.c.b16 %v1862, %v1861
        %v1908 = vpack.c.b16 %v1864, %v1863
        %v1909 = vpack.c.b16 %v1866, %v1865
        %v1910 = vpack.c.b16 %v1868, %v1867
        %v1911 = vpack.c.b16 %v1870, %v1869
        %v1912 = vpack.c.b16 %v1872, %v1871
        %v1913 = vpack.c.b16 %v1874, %v1873
        %v1914 = vpack.c.b16 %v1876, %v1875
        %v1915 = vpack.c.b16 %v1878, %v1877
        %v1916 = vpack.c.b16 %v1880, %v1879
        %v1917 = vpack.c.b16 %v1882, %v1881
        %v1918 = vpack.c.b16 %v1884, %v1883
        %v1919 = vpack.c.b16 %v1886, %v1885
        %v1920 = vpack.c.b16 %v1888, %v1887
        %v1921 = vpack.c.b16 %v1890, %v1889
        %v1922 = vpack.c.b16 %v1892, %v1891
        %v1923 = vpack.c.b16 %v1894, %v1893
        %v1924 = vpack.c.b16 %v1896, %v1895
        %v1925 = vpack.c.b16 %v1898, %v1897
        %v1926 = vpack.c.b16 %v1900, %v1899
        %v1927 = vpack.c.b16 %v1902, %v1901
        %v1928 = vpack.c.b16 %v1904, %v1903
        %1953 = vmatprep.subr.bf16.mxu0 0
        %1954 = vmatpush1.bf16.msra.mxu0 %v1912
        %1955 = vmatprep.subr.bf16.mxu0 0
        %1956 = vmatpush1.bf16.msra.mxu0 %v1911
        %1957 = vmatprep.subr.bf16.mxu0 0
        %1958 = vmatpush1.bf16.msra.mxu0 %v1910
        %1959 = vmatprep.subr.bf16.mxu0 0
        %1960 = vmatpush1.bf16.msra.mxu0 %v1909
        %1961 = vmatprep.subr.bf16.mxu0 0
        %1962 = vmatpush1.bf16.msra.mxu0 %v1908
        %1963 = vmatprep.subr.bf16.mxu0 0
        %1964 = vmatpush1.bf16.msra.mxu0 %v1907
        %1965 = vmatprep.subr.bf16.mxu0 0
        %1966 = vmatpush1.bf16.msra.mxu0 %v1906
        %1967 = vmatprep.subr.bf16.mxu0 0
        %1968 = vmatpush1.bf16.msra.mxu0 %v1905
        %1969 = vmatprep.subr.bf16.mxu0 0
        %1970 = vmatpush2.bf16.msra.mxu0 %v1920
        %1971 = vmatprep.subr.bf16.mxu0 0
        %1972 = vmatpush2.bf16.msra.mxu0 %v1919
        %1973 = vmatprep.subr.bf16.mxu0 0
        %1974 = vmatpush2.bf16.msra.mxu0 %v1918
        %1975 = vmatprep.subr.bf16.mxu0 0
        %1976 = vmatpush2.bf16.msra.mxu0 %v1917
        %1977 = vmatprep.subr.bf16.mxu0 0
        %1978 = vmatpush2.bf16.msra.mxu0 %v1916
        %1979 = vmatprep.subr.bf16.mxu0 0
        %1980 = vmatpush2.bf16.msra.mxu0 %v1915
        %1981 = vmatprep.subr.bf16.mxu0 0
        %1982 = vmatpush2.bf16.msra.mxu0 %v1914
        %1983 = vmatprep.subr.bf16.mxu0 0
        %1984 = vmatpush2.bf16.msra.mxu0 %v1913
        %1985 = vmatprep.mubr.bf16.mxu0 %v1750
        %1986 = vmatmul.mubr.bf16.gmra.mxu0 %v1749
        %v1987 = vpop.f32.mrf.mxu0
        %v1988 = vadd.f32 %v1808, %v1987
        %v1989 = vpop.f32.mrf.mxu0
        %v1990 = vpop.f32.mrf.mxu0
        %v1991 = vadd.f32 %v1808, %v1990
        %v1992 = vpop.f32.mrf.mxu0
        %1993 = vmatprep.mubr.bf16.mxu0 %v1753
        %1994 = vmatmul.mubr.bf16.gmra.mxu0 %v1752
        %v1995 = vpop.f32.mrf.mxu0
        %v1996 = vadd.f32 %v1808, %v1995
        %v1997 = vpop.f32.mrf.mxu0
        %v1998 = vpop.f32.mrf.mxu0
        %v1999 = vadd.f32 %v1808, %v1998
        %v2000 = vpop.f32.mrf.mxu0
        %2001 = vdwg.mxu0
        %2002 = vmatprep.subr.bf16.mxu0 0
        %2003 = vmatpush1.bf16.msra.mxu0 %v1928
        %2004 = vmatprep.subr.bf16.mxu0 0
        %2005 = vmatpush1.bf16.msra.mxu0 %v1927
        %2006 = vmatprep.subr.bf16.mxu0 0
        %2007 = vmatpush1.bf16.msra.mxu0 %v1926
        %2008 = vmatprep.subr.bf16.mxu0 0
        %2009 = vmatpush1.bf16.msra.mxu0 %v1925
        %2010 = vmatprep.subr.bf16.mxu0 0
        %2011 = vmatpush1.bf16.msra.mxu0 %v1924
        %2012 = vmatprep.subr.bf16.mxu0 0
        %2013 = vmatpush1.bf16.msra.mxu0 %v1923
        %2014 = vmatprep.subr.bf16.mxu0 0
        %2015 = vmatpush1.bf16.msra.mxu0 %v1922
        %2016 = vmatprep.subr.bf16.mxu0 0
        %2017 = vmatpush1.bf16.msra.mxu0 %v1921
        %2018 = vmatprep.subr.bf16.mxu0 0
        %2019 = vmatpush2.bf16.msra.mxu0 0
        %2020 = vmatprep.subr.bf16.mxu0 0
        %2021 = vmatpush2.bf16.msra.mxu0 0
        %2022 = vmatprep.subr.bf16.mxu0 0
        %2023 = vmatpush2.bf16.msra.mxu0 0
        %2024 = vmatprep.subr.bf16.mxu0 0
        %2025 = vmatpush2.bf16.msra.mxu0 0
        %2026 = vmatprep.subr.bf16.mxu0 0
        %2027 = vmatpush2.bf16.msra.mxu0 0
        %2028 = vmatprep.subr.bf16.mxu0 0
        %2029 = vmatpush2.bf16.msra.mxu0 0
        %2030 = vmatprep.subr.bf16.mxu0 0
        %2031 = vmatpush2.bf16.msra.mxu0 0
        %2032 = vmatprep.subr.bf16.mxu0 0
        %2033 = vmatpush2.bf16.msra.mxu0 0
        %2034 = vmatprep.mubr.bf16.mxu0 0
        %2035 = vmatmul.mubr.bf16.gmra.mxu0 %v1751
        %v2036 = vpop.f32.mrf.mxu0
        %v2037 = vadd.f32 %v1988, %v2036
        %v2038 = vpop.f32.mrf.mxu0
        %v2039 = vpop.f32.mrf.mxu0
        %v2040 = vadd.f32 %v1991, %v2039
        %v2041 = vpop.f32.mrf.mxu0
        %2042 = vmatprep.mubr.bf16.mxu0 0
        %2043 = vmatmul.mubr.bf16.gmra.mxu0 %v1754
        %v2044 = vpop.f32.mrf.mxu0
        %v2045 = vadd.f32 %v1996, %v2044
        %v2046 = vpop.f32.mrf.mxu0
        %v2047 = vpop.f32.mrf.mxu0
        %v2048 = vadd.f32 %v1999, %v2047
        %v2049 = vpop.f32.mrf.mxu0
        %2050 = vdwg.mxu0
        %2051 = vadd.xlane.f32.xlu0 %v2037
        %v2052 = vpop.xlane.xlu0 %2051
        %2053 = vadd.xlane.f32.xlu0 %v2040
        %v2054 = vpop.xlane.xlu0 %2053
        %2055 = vadd.xlane.f32.xlu0 %v2045
        %v2056 = vpop.xlane.xlu0 %2055
        %2057 = vadd.xlane.f32.xlu0 %v2048
        %v2058 = vpop.xlane.xlu0 %2057
        %v2059 = vmul.f32 %v2052, %v900
        %v2060 = vmul.f32 %v2054, %v900
        %v2061 = vmul.f32 %v2056, %v900
        %v2062 = vmul.f32 %v2058, %v900
        %v2063 = vsub.f32 %v2037, %v2059
        %v2064 = vsub.f32 %v2040, %v2060
        %v2065 = vsub.f32 %v2045, %v2061
        %v2066 = vsub.f32 %v2048, %v2062
        %v2067 = vmul.f32 %v2063, %v2063
        %v2068 = vmul.f32 %v2064, %v2064
        %v2069 = vmul.f32 %v2065, %v2065
        %v2070 = vmul.f32 %v2066, %v2066
        %2071 = vadd.xlane.f32.xlu0 %v2067
        %v2072 = vpop.xlane.xlu0 %2071
        %2073 = vadd.xlane.f32.xlu0 %v2068
        %v2074 = vpop.xlane.xlu0 %2073
        %2075 = vadd.xlane.f32.xlu0 %v2069
        %v2076 = vpop.xlane.xlu0 %2075
        %2077 = vadd.xlane.f32.xlu0 %v2070
        %v2078 = vpop.xlane.xlu0 %2077
        %v2079 = vmul.f32 %v2072, %v900
        %v2080 = vmul.f32 %v2074, %v900
        %v2081 = vmul.f32 %v2076, %v900
        %v2082 = vmul.f32 %v2078, %v900
        %v2083 = vadd.f32 %v2079, 1e-08
        %v2084 = vadd.f32 %v2080, 1e-08
        %v2085 = vadd.f32 %v2081, 1e-08
        %v2086 = vadd.f32 %v2082, 1e-08
        %v2087 = vrsqrt.pop %v2083
        %v2088 = vrsqrt.pop %v2084
        %v2089 = vrsqrt.pop %v2085
        %v2090 = vrsqrt.pop %v2086
        %v2091 = vmul.f32 %v2063, %v2087
        %v2092 = vmul.f32 %v2064, %v2088
        %v2093 = vmul.f32 %v2065, %v2089
        %v2094 = vmul.f32 %v2066, %v2090
        %v2095 = vld [vmem:[%s10 + $0x1] sm:$0x1]
        %v2096 = vlaneseq
        %v2097 = vshrl.u32 %v2096, 7
        %v2098 = vsub.s32 0, %v2097
        %v2099 = vrot.slane %v2095, %v2098
        %v2100 = vmul.f32 %v2091, %v2099
        %v2101 = vmul.f32 %v2092, %v2099
        %v2102 = vmul.f32 %v2093, %v2099
        %v2103 = vmul.f32 %v2094, %v2099
        %v2104 = vld [vmem:[%s11 + $0x1] sm:$0x1]
        %v2105 = vlaneseq
        %v2106 = vshrl.u32 %v2105, 7
        %v2107 = vsub.s32 0, %v2106
        %v2108 = vrot.slane %v2104, %v2107
        %v2109 = vadd.f32 %v2100, %v2108
        %v2110 = vadd.f32 %v2101, %v2108
        %v2111 = vadd.f32 %v2102, %v2108
        %v2112 = vadd.f32 %v2103, %v2108
        %v2113 = vmax.f32 %v2109, 0.0
        %v2114 = vmax.f32 %v2110, 0.0
        %v2115 = vmax.f32 %v2111, 0.0
        %v2116 = vmax.f32 %v2112, 0.0
        %s2117 = sld [smem:[#allocation4 + $0x1]]
        %v2118 = vstv %s2117
        %v2119 = vmul.f32 %v2118, %v2113
        %v2120 = vmul.f32 %v2118, %v2114
        %v2121 = vmul.f32 %v2118, %v2115
        %v2122 = vmul.f32 %v2118, %v2116
        %v2123 = vadd.f32 %v2119, %v1348
        %v2124 = vadd.f32 %v2120, %v1349
        %v2125 = vadd.f32 %v2121, %v1350
        %v2126 = vadd.f32 %v2122, %v1351
        %v2127 = vpack.c.bf16 %v2124, %v2123
        %v2128 = vpack.c.bf16 %v2126, %v2125
        %v2129 = vld [vmem:[#allocation10] sm:$0xf]
        %v2130 = vld [vmem:[#allocation10 + $0x4] sm:$0xf]
        %v2131 = vld [vmem:[#allocation10 + $0x8] sm:$0xf]
        %v2132 = vld [vmem:[#allocation10 + $0xc] sm:$0xf]
        %v2133 = vld [vmem:[#allocation10 + $0x10] sm:$0xf]
        %v2134 = vld [vmem:[#allocation10 + $0x14] sm:$0xf]
        %v2135 = vld [vmem:[#allocation10 + $0x18] sm:$0xf]
        %v2136 = vld [vmem:[#allocation10 + $0x1c] sm:$0xf]
        %v2137 = vld [vmem:[#allocation10 + $0x20] sm:$0xf]
        %v2138 = vld [vmem:[#allocation10 + $0x24] sm:$0xf]
        %v2139 = vld [vmem:[#allocation10 + $0x28] sm:$0xf]
        %v2140 = vld [vmem:[#allocation10 + $0x2c] sm:$0xf]
        %v2141 = vld [vmem:[#allocation10 + $0x30] sm:$0xf]
        %v2142 = vld [vmem:[#allocation10 + $0x34] sm:$0xf]
        %v2143 = vld [vmem:[#allocation10 + $0x38] sm:$0xf]
        %v2144 = vld [vmem:[#allocation10 + $0x3c] sm:$0xf]
        %v2145 = vld [vmem:[%s13] sm:$0x1]
        %v2147 = vlaneseq
        %v2148 = vshrl.u32 %v2147, 7
        %v2149 = vsub.s32 0, %v2148
        %v2150 = vrot.slane %v2145, %v2149
        %v2168 = vunpack.c.l.b16 %v2129
        %v2169 = vunpack.c.l.b16 %v2130
        %v2170 = vunpack.c.l.b16 %v2131
        %v2171 = vunpack.c.l.b16 %v2132
        %v2172 = vunpack.c.l.b16 %v2133
        %v2173 = vunpack.c.l.b16 %v2134
        %v2174 = vunpack.c.l.b16 %v2135
        %v2175 = vunpack.c.l.b16 %v2136
        %v2176 = vunpack.c.l.b16 %v2137
        %v2177 = vunpack.c.l.b16 %v2138
        %v2178 = vunpack.c.l.b16 %v2139
        %v2179 = vunpack.c.l.b16 %v2140
        %v2180 = vunpack.c.l.b16 %v2141
        %v2181 = vunpack.c.l.b16 %v2142
        %v2182 = vunpack.c.l.b16 %v2143
        %v2183 = vunpack.c.l.b16 %v2144
        %v2184 = vpack.c.b16 %v2169, %v2168
        %v2185 = vpack.c.b16 %v2171, %v2170
        %v2186 = vpack.c.b16 %v2173, %v2172
        %v2187 = vpack.c.b16 %v2175, %v2174
        %v2188 = vpack.c.b16 %v2177, %v2176
        %v2189 = vpack.c.b16 %v2179, %v2178
        %v2190 = vpack.c.b16 %v2181, %v2180
        %v2191 = vpack.c.b16 %v2183, %v2182
        %2200 = vmatprep.subr.bf16.mxu0 0
        %2201 = vmatpush1.bf16.msra.mxu0 %v2191
        %2202 = vmatprep.subr.bf16.mxu0 0
        %2203 = vmatpush1.bf16.msra.mxu0 %v2190
        %2204 = vmatprep.subr.bf16.mxu0 0
        %2205 = vmatpush1.bf16.msra.mxu0 %v2189
        %2206 = vmatprep.subr.bf16.mxu0 0
        %2207 = vmatpush1.bf16.msra.mxu0 %v2188
        %2208 = vmatprep.subr.bf16.mxu0 0
        %2209 = vmatpush1.bf16.msra.mxu0 %v2187
        %2210 = vmatprep.subr.bf16.mxu0 0
        %2211 = vmatpush1.bf16.msra.mxu0 %v2186
        %2212 = vmatprep.subr.bf16.mxu0 0
        %2213 = vmatpush1.bf16.msra.mxu0 %v2185
        %2214 = vmatprep.subr.bf16.mxu0 0
        %2215 = vmatpush1.bf16.msra.mxu0 %v2184
        %2216 = vmatprep.subr.bf16.mxu0 0
        %2217 = vmatpush2.bf16.msra.mxu0 0
        %2218 = vmatprep.subr.bf16.mxu0 0
        %2219 = vmatpush2.bf16.msra.mxu0 0
        %2220 = vmatprep.subr.bf16.mxu0 0
        %2221 = vmatpush2.bf16.msra.mxu0 0
        %2222 = vmatprep.subr.bf16.mxu0 0
        %2223 = vmatpush2.bf16.msra.mxu0 0
        %2224 = vmatprep.subr.bf16.mxu0 0
        %2225 = vmatpush2.bf16.msra.mxu0 0
        %2226 = vmatprep.subr.bf16.mxu0 0
        %2227 = vmatpush2.bf16.msra.mxu0 0
        %2228 = vmatprep.subr.bf16.mxu0 0
        %2229 = vmatpush2.bf16.msra.mxu0 0
        %2230 = vmatprep.subr.bf16.mxu0 0
        %2231 = vmatpush2.bf16.msra.mxu0 0
        %2232 = vmatprep.mubr.bf16.mxu0 0
        %2233 = vmatmul.mubr.bf16.gmra.mxu0 %v2127
        %v2234 = vpop.f32.mrf.mxu0
        %v2235 = vadd.f32 %v2150, %v2234
        %v2236 = vpop.f32.mrf.mxu0
        %v2237 = vpop.f32.mrf.mxu0
        %v2238 = vadd.f32 %v2150, %v2237
        %v2239 = vpop.f32.mrf.mxu0
        %2240 = vmatprep.mubr.bf16.mxu0 0
        %2241 = vmatmul.mubr.bf16.gmra.mxu0 %v2128
        %v2242 = vpop.f32.mrf.mxu0
        %v2243 = vadd.f32 %v2150, %v2242
        %v2244 = vpop.f32.mrf.mxu0
        %v2245 = vpop.f32.mrf.mxu0
        %v2246 = vadd.f32 %v2150, %v2245
        %v2247 = vpop.f32.mrf.mxu0
        %2248 = vdwg.mxu0
        %2249 = vst [vmem:[%s484] sm:$0xff] %v2235
        %2250 = vst [vmem:[%s484 + $0x8] sm:$0xff] %v2238
        %2251 = vst [vmem:[%s484 + $0x10] sm:$0xff] %v2243
        %2252 = vst [vmem:[%s484 + $0x18] sm:$0xff] %v2246
        %s2253 = sand.u32 %s322, 1
        %s2254 = scalar_lea.sflag [#allocation7], %s2253
        %s2255 = sand.u32 %s322, 1
        %s2256 = smul.addr %s2255, 32
        %s2257 = scalar_lea.vmem [#allocation11], %s2256
        // Predicated region
        $region85: #{tpu_custom_call.1} parent=71 // pred_check
          %p2258 = pneg %p332
        $region86: #{tpu_custom_call.1} parent=71 // pred_check_branch
          %2260 = sbr.rel (%p2258) target = $region88
        $region87: #{tpu_custom_call.1} parent=71 // pred_region
          %s2262 = ssub.s32 512, 512
          %2263 = vsyncadd %s2254, %s2262
          %s2264 = smul.addr %s36, 4
          %s2265 = smul.addr %s2264, 128
          %s2266 = scalar_lea.hbm %s14, %s2265
          %s2267 = sshll.u32 %s2257, 4
          %s2268 = int_to_ptr.vmem [resolvable:$true] %s2267
          %2273 = dma.vmem_to_hbm [thread:$0]  %s2268, 512, %s2266, %s2254, 128, 128, 8
        $region88: #{tpu_custom_call.1} parent=71 // pred_fallthru
          _
      $region72: #{tpu_custom_call.1} parent=5 // pred_fallthru
        _
      %p2274 = scmp.le.s32.totalorder 2, %s31
      // Predicated region
      $region89: #{tpu_custom_call.1} parent=5 // pred_check
        %p2275 = pneg %p2274
      $region90: #{tpu_custom_call.1} parent=5 // pred_check_branch
        %2277 = sbr.rel (%p2275) target = $region92
      $region91: #{tpu_custom_call.1} parent=5 // pred_region
        %s2278 = ssub.s32 %s31, 2
        // Predicated region
        $region93: #{tpu_custom_call.1} parent=91 // pred_check
          %p2279 = pneg %p338
        $region94: #{tpu_custom_call.1} parent=91 // pred_check_branch
          %2281 = sbr.rel (%p2279) target = $region96
        $region95: #{tpu_custom_call.1} parent=91 // pred_region
          %s2282 = sand.u32 %s323, 1
          %s2283 = scalar_lea.sflag [#allocation7], %s2282
          %s2284 = sand.u32 %s323, 1
          %s2285 = smul.addr %s2284, 32
          %s2286 = scalar_lea.vmem [#allocation11], %s2285
          %2287 = dma.done %s2283, 512
        $region96: #{tpu_custom_call.1} parent=91 // pred_fallthru
          _
      $region92: #{tpu_custom_call.1} parent=5 // pred_fallthru
        _
    $region6: #{tpu_custom_call.1} parent=1 // loop_footer
      %s35 = sadd.s32 1, %s31
    $region7: #{tpu_custom_call.1} parent=1 // loop_footer_branch
      %30 = sbr.rel target = $region3
    $region8: #{tpu_custom_call.1} parent=1 // loop_exit
      _
    %2288 = vsyncpa [#allocation6], 1
    %s2289 = scalar_lea.sflag [#allocation6], 1
    %2290 = vsyncpa %s2289, 1
    %2291 = vsyncpa [#allocation9], 1
    %2292 = vsyncpa [#allocation7], 1
    %s2293 = scalar_lea.sflag [#allocation7], 1
    %2294 = vsyncpa %s2293, 1

</llo_original>
